<compile_context>
chip_gen: v5e
topology: v5e:2x2
jax: 0.10.0
libtpu: 0.0.40
codegen_flags: <defaults>
</compile_context>

<pallas_src>
import functools

import jax
import jax.numpy as jnp
from jax.experimental import pallas as pl
from jax.experimental.pallas import tpu as pltpu

BN_EPS = 1e-5
LANE = 128


def _vmem_capacity_bytes():
    try:
        info = pltpu.get_tpu_info()
        cap = getattr(info, "vmem_capacity_bytes", None)
        if cap:
            return int(cap)
    except Exception:
        pass
    return 64 * 1024 * 1024   # conservative (v7x-sized) fallback, safe on all gens


_VMEM_CAPACITY = _vmem_capacity_bytes()
_VMEM_LIMIT_CAP = min(int(0.90 * _VMEM_CAPACITY), 120 * 1024 * 1024)
_FUSED_BUDGET = int(0.70 * _VMEM_CAPACITY)


def _round_up(x, m):
    return ((x + m - 1) // m) * m


def _pad2(arr, rows, cols):
    out = jnp.zeros((rows, cols), arr.dtype)
    return out.at[:arr.shape[0], :arr.shape[1]].set(arr)


def _pad3(arr, rows, cols):
    out = jnp.zeros((arr.shape[0], rows, cols), arr.dtype)
    return out.at[:, :arr.shape[1], :arr.shape[2]].set(arr)


def _largest_divisor_tile(n_pad, cap, min_tiles=1):
    """Largest multiple-of-128 divisor of n_pad that is <= cap and leaves >= min_tiles."""
    c = min(cap, n_pad)
    c -= c % LANE
    while c >= LANE:
        if n_pad % c == 0 and n_pad // c >= min_tiles:
            return c
        c -= LANE
    return LANE


def _compiler_params(est_bytes, dims=None):
    limit = int(min(est_bytes + (16 << 20), _VMEM_LIMIT_CAP))
    limit = max(limit, 16 << 20)
    return pltpu.CompilerParams(dimension_semantics=dims, vmem_limit_bytes=limit)


# ---------------------------------------------------------------------------
# Fused single-call kernel: whole (padded) graph resident in VMEM.
# A_hat is DMA'd in manually (overlapped with the first matmul) and reused per layer.
# ---------------------------------------------------------------------------
def mpnn_fused_kernel(a_hbm, x_ref, wf0_ref, b0_ref, wf_ref, b_ref,
                      scale_ref, shift_ref, wp_ref, bp_ref,
                      out_ref, a_vmem, a_sem, *, num_layers, h_pad):
    # Start the (large) A_hat HBM->VMEM DMA and hide it behind layer-0's X @ [Wg|Wl],
    # which does not need A.
    a_copy = pltpu.make_async_copy(a_hbm, a_vmem, a_sem.at[0])
    a_copy.start()

    def bn_relu(h, i):   # folded BatchNorm (running stats) + ReLU, f32 math
        return jnp.maximum(h * scale_ref[i:i + 1, :] + shift_ref[i:i + 1, :], 0.0)

    xw = jnp.dot(x_ref[...], wf0_ref[...], preferred_element_type=jnp.float32)  # [N, 2H]
    a_copy.wait()
    a = a_vmem[...]                       # [N_pad, N_pad] bf16, reused every layer

    def finish_layer(xw_f32, bias_f32, bn_idx):
        xwg = xw_f32[:, :h_pad]           # GCN half
        xwl = xw_f32[:, h_pad:]           # residual Linear half
        agg = jnp.dot(a, xwg.astype(jnp.bfloat16), preferred_element_type=jnp.float32)
        return bn_relu(agg + xwl + bias_f32, bn_idx)

    h = finish_layer(xw, b0_ref[...], 0)
    for i in range(num_layers - 1):       # statically unrolled
        xw = jnp.dot(h.astype(jnp.bfloat16), wf_ref[i],
                     preferred_element_type=jnp.float32)
        h = finish_layer(xw, b_ref[i:i + 1, :], i + 1)

    out_ref[...] = jnp.dot(h.astype(jnp.bfloat16), wp_ref[...],
                           preferred_element_type=jnp.float32) + bp_ref[...]


# ---------------------------------------------------------------------------
# Tiled path kernels (per-layer pallas_calls, row-parallel grid, A streamed).
# ---------------------------------------------------------------------------
def matmul_kernel(x_ref, w_ref, out_ref):
    out_ref[...] = jnp.dot(x_ref[...], w_ref[...],
                           preferred_element_type=jnp.float32).astype(out_ref.dtype)


def aggregate_kernel(a_ref, xwg_ref, xwl_ref, b_ref, scale_ref, shift_ref,
                     out_ref, acc_ref):
    # acc[i] = sum_k A[i, k] @ XWg[k]   (f32 accumulator, pl.when init/finalize)
    k = pl.program_id(1)

    @pl.when(k == 0)
    def _():
        acc_ref[...] = jnp.zeros_like(acc_ref)

    acc_ref[...] += jnp.dot(a_ref[...], xwg_ref[...],
                            preferred_element_type=jnp.float32)

    @pl.when(k == pl.num_programs(1) - 1)
    def _():
        h = acc_ref[...] + xwl_ref[...] + b_ref[...]
        h = jnp.maximum(h * scale_ref[...] + shift_ref[...], 0.0)
        out_ref[...] = h.astype(out_ref.dtype)


def aggregate_project_kernel(a_ref, xwg_ref, xwl_ref, b_ref, scale_ref, shift_ref,
                             wp_ref, bp_ref, out_ref, acc_ref):
    # Same as aggregate_kernel, but the finalize fuses the output projection:
    # out = relu(BN(h)) @ Wp + bp
    k = pl.program_id(1)

    @pl.when(k == 0)
    def _():
        acc_ref[...] = jnp.zeros_like(acc_ref)

    acc_ref[...] += jnp.dot(a_ref[...], xwg_ref[...],
                            preferred_element_type=jnp.float32)

    @pl.when(k == pl.num_programs(1) - 1)
    def _():
        h = acc_ref[...] + xwl_ref[...] + b_ref[...]
        h = jnp.maximum(h * scale_ref[...] + shift_ref[...], 0.0)
        out_ref[...] = (jnp.dot(h.astype(jnp.bfloat16), wp_ref[...],
                                preferred_element_type=jnp.float32) + bp_ref[...])


def _rowwise_matmul(x, w, *, out_dtype, row_tile):
    """out[rows] = x[rows] @ w, row tiles sharded across TensorCores (no bias)."""
    n_pad, k = x.shape
    m = w.shape[1]
    out_item = jnp.dtype(out_dtype).itemsize
    est = (2 * row_tile * k * x.dtype.itemsize        # x blocks (double-buffered)
           + k * m * w.dtype.itemsize                 # weight (resident)
           + 2 * row_tile * m * out_item)             # output blocks
    return pl.pallas_call(
        matmul_kernel,
        out_shape=jax.ShapeDtypeStruct((n_pad, m), out_dtype),
        grid_spec=pltpu.PrefetchScalarGridSpec(
            num_scalar_prefetch=0,
            grid=(n_pad // row_tile,),
            in_specs=[pl.BlockSpec((row_tile, k), lambda i: (i, 0)),
                      pl.BlockSpec((k, m), lambda i: (0, 0))],
            out_specs=pl.BlockSpec((row_tile, m), lambda i: (i, 0))),
        compiler_params=_compiler_params(est, dims=("parallel",)),
        cost_estimate=pl.CostEstimate(
            flops=2 * n_pad * k * m, transcendentals=0,
            bytes_accessed=int(n_pad * k * x.dtype.itemsize
                               + k * m * w.dtype.itemsize + n_pad * m * out_item)),
    )(x, w)


def _aggregate(a, xw, bsum, scale, shift, *, wp=None, bp=None, row_tile, col_tile):
    """x_new[rows] = relu(BN(A[rows,:] @ XWg + XWl[rows] + bsum))  (optionally @ Wp + bp),
    with A_hat streamed in (row_tile x col_tile) blocks and an f32 VMEM accumulator."""
    n_pad = a.shape[0]
    h_pad = bsum.shape[1]
    project = wp is not None
    out_cols = wp.shape[1] if project else h_pad
    out_dtype = jnp.float32 if project else jnp.bfloat16
    out_item = jnp.dtype(out_dtype).itemsize

    bcast = pl.BlockSpec((1, h_pad), lambda i, k: (0, 0))
    in_specs = [
        pl.BlockSpec((row_tile, col_tile), lambda i, k: (i, k)),   # A_hat block
        pl.BlockSpec((col_tile, h_pad), lambda i, k: (k, 0)),      # XW[:, :H]   (GCN half)
        pl.BlockSpec((row_tile, h_pad), lambda i, k: (i, 1)),      # XW[rows, H:] (residual)
        bcast,                                                     # bg + bl
        bcast,                                                     # BN scale
        bcast,                                                     # BN shift
    ]
    args = [a, xw, xw, bsum, scale, shift]
    kernel = aggregate_kernel
    if project:
        in_specs += [pl.BlockSpec((h_pad, out_cols), lambda i, k: (0, 0)),   # Wp
                     pl.BlockSpec((1, out_cols), lambda i, k: (0, 0))]       # bp
        args += [wp, bp]
        kernel = aggregate_project_kernel

    est = (2 * row_tile * col_tile * 2            # A blocks (double-buffered)
           + 2 * col_tile * h_pad * 2             # XWg blocks
           + 2 * row_tile * h_pad * 2             # XWl blocks
           + 2 * row_tile * out_cols * out_item   # output blocks
           + row_tile * h_pad * 4                 # accumulator scratch
           + 6 * h_pad * 4
           + (h_pad * out_cols * 2 + out_cols * 4 if project else 0))

    flops = 2 * n_pad * n_pad * h_pad + (2 * n_pad * h_pad * out_cols if project else 0)
    bytes_acc = (n_pad * n_pad * 2 + n_pad * 2 * h_pad * 2
                 + n_pad * out_cols * out_item + 8 * h_pad * 4)

    return pl.pallas_call(
        kernel,
        out_shape=jax.ShapeDtypeStruct((n_pad, out_cols), out_dtype),
        grid_spec=pltpu.PrefetchScalarGridSpec(
            num_scalar_prefetch=0,
            grid=(n_pad // row_tile, n_pad // col_tile),
            in_specs=in_specs,
            out_specs=pl.BlockSpec((row_tile, out_cols), lambda i, k: (i, 0)),
            scratch_shapes=[pltpu.VMEM((row_tile, h_pad), jnp.float32)]),
        compiler_params=_compiler_params(est, dims=("parallel", "arbitrary")),
        cost_estimate=pl.CostEstimate(flops=int(flops), transcendentals=0,
                                      bytes_accessed=int(bytes_acc)),
    )(*args)


# ---------------------------------------------------------------------------
# Wrapper: padding, weight fusion, BN folding, path selection.
# ---------------------------------------------------------------------------
def _prepare(a_hat, x, params, num_layers):
    n, cin = x.shape
    hidden = params["wg0"].shape[1]
    out_c = params["wp"].shape[1]
    n_pad = _round_up(n, LANE)
    cin_pad = _round_up(cin, LANE)
    h_pad = _round_up(hidden, LANE)
    o_pad = _round_up(out_c, LANE)
    L1 = num_layers - 1

    a_p = _pad2(a_hat, n_pad, n_pad).astype(jnp.bfloat16)
    x_p = _pad2(x, n_pad, cin_pad).astype(jnp.bfloat16)

    # fused [Wg | Wl] weights (bf16 MXU operands), summed biases (f32)
    wf0 = jnp.concatenate([_pad2(params["wg0"], cin_pad, h_pad),
                           _pad2(params["wl0"], cin_pad, h_pad)],
                          axis=1).astype(jnp.bfloat16)
    bsum0 = _pad2(params["bg0"] + params["bl0"], 1, h_pad)

    if L1 > 0:
        wf = jnp.concatenate([_pad3(params["wg"], h_pad, h_pad),
                              _pad3(params["wl"], h_pad, h_pad)],
                             axis=2).astype(jnp.bfloat16)
        bsum = _pad2(params["bg"] + params["bl"], L1, h_pad)
    else:  # keep non-empty arrays so pallas_call never sees a 0-sized operand
        wf = jnp.zeros((1, h_pad, 2 * h_pad), jnp.bfloat16)
        bsum = jnp.zeros((1, h_pad), jnp.float32)

    # fold BatchNorm (running stats) into scale/shift: h*scale + shift
    scale_full = params["bn_gamma"] * jax.lax.rsqrt(params["bn_var"] + BN_EPS)
    shift_full = params["bn_beta"] - params["bn_mean"] * scale_full
    scale = _pad2(scale_full, num_layers, h_pad)
    shift = _pad2(shift_full, num_layers, h_pad)

    wp = _pad2(params["wp"], h_pad, o_pad).astype(jnp.bfloat16)
    bp = _pad2(params["bp"], 1, o_pad)

    return dict(a=a_p, x=x_p, wf0=wf0, bsum0=bsum0, wf=wf, bsum=bsum,
                scale=scale, shift=shift, wp=wp, bp=bp,
                n_pad=n_pad, cin_pad=cin_pad, h_pad=h_pad, o_pad=o_pad)


def _fused_working_set(prep, num_layers):
    keys = ("a", "x", "wf0", "bsum0", "wf", "bsum", "scale", "shift", "wp", "bp")
    io = sum(int(prep[k].size) * prep[k].dtype.itemsize for k in keys)
    io += prep["n_pad"] * prep["o_pad"] * 4                       # output
    inter = 4 * prep["n_pad"] * 2 * prep["h_pad"] * 4             # live f32 intermediates
    return io, inter


def _mpnn_fused(prep, num_layers):
    n_pad, cin_pad = prep["n_pad"], prep["cin_pad"]
    h_pad, o_pad = prep["h_pad"], prep["o_pad"]
    io, inter = _fused_working_set(prep, num_layers)
    flops = (2 * n_pad * cin_pad * 2 * h_pad + 2 * n_pad * n_pad * h_pad
             + (num_layers - 1) * (2 * n_pad * h_pad * 2 * h_pad + 2 * n_pad * n_pad * h_pad)
             + 2 * n_pad * h_pad * o_pad)
    kernel = functools.partial(mpnn_fused_kernel, num_layers=num_layers, h_pad=h_pad)
    vmem_spec = pl.BlockSpec(memory_space=pltpu.MemorySpace.VMEM)
    any_spec = pl.BlockSpec(memory_space=pl.ANY)   # A stays in HBM, DMA'd manually
    args = (prep["a"], prep["x"], prep["wf0"], prep["bsum0"], prep["wf"], prep["bsum"],
            prep["scale"], prep["shift"], prep["wp"], prep["bp"])
    return pl.pallas_call(
        kernel,
        out_shape=jax.ShapeDtypeStruct((n_pad, o_pad), jnp.float32),
        in_specs=[any_spec] + [vmem_spec] * (len(args) - 1),
        out_specs=vmem_spec,
        scratch_shapes=[pltpu.VMEM((n_pad, n_pad), jnp.bfloat16),
                        pltpu.SemaphoreType.DMA((1,))],
        compiler_params=_compiler_params(io + inter),
        cost_estimate=pl.CostEstimate(flops=int(flops), transcendentals=0,
                                      bytes_accessed=int(io)),
    )(*args)


def _mpnn_tiled(prep, num_layers, row_tile=None, col_tile=None):
    n_pad, h_pad = prep["n_pad"], prep["h_pad"]
    if row_tile is None:
        # keep >= 2 row tiles when possible so the "parallel" axis splits across the
        # two TensorCores on v7x; bigger tiles amortize the ~0.35us per-step overhead.
        row_tile = _largest_divisor_tile(n_pad, 512,
                                         min_tiles=2 if n_pad > LANE else 1)
    if col_tile is None:
        col_tile = _largest_divisor_tile(n_pad, 1024)
    assert n_pad % row_tile == 0 and n_pad % col_tile == 0

    x_cur = prep["x"]
    for l in range(num_layers):
        w = prep["wf0"] if l == 0 else prep["wf"][l - 1]
        bsum = prep["bsum0"] if l == 0 else prep["bsum"][l - 1:l]
        xw = _rowwise_matmul(x_cur, w, out_dtype=jnp.bfloat16, row_tile=row_tile)
        last = (l == num_layers - 1)
        x_cur = _aggregate(prep["a"], xw, bsum,
                           prep["scale"][l:l + 1], prep["shift"][l:l + 1],
                           wp=prep["wp"] if last else None,
                           bp=prep["bp"] if last else None,
                           row_tile=row_tile, col_tile=col_tile)
    return x_cur


def mpnn_forward(a_hat, x, params, num_layers, *, force_tiled=False,
                 row_tile=None, col_tile=None):
    n = x.shape[0]
    out_c = params["wp"].shape[1]
    prep = _prepare(a_hat, x, params, num_layers)
    io, inter = _fused_working_set(prep, num_layers)
    if force_tiled or (io + inter) > _FUSED_BUDGET:
        out_p = _mpnn_tiled(prep, num_layers, row_tile=row_tile, col_tile=col_tile)
    else:
        out_p = _mpnn_fused(prep, num_layers)
    return out_p[:n, :out_c]


# ---------------------------------------------------------------------------
# Pure-JAX reference (f32) + test harness helpers.
# ---------------------------------------------------------------------------
def mpnn_reference(a_hat, x, params, num_layers):
    def bn_relu(h, i):
        g = params["bn_gamma"][i]
        b = params["bn_beta"][i]
        m = params["bn_mean"][i]
        v = params["bn_var"][i]
        h = (h - m) / jnp.sqrt(v + BN_EPS) * g + b
        return jnp.maximum(h, 0.0)

    h = a_hat @ (x @ params["wg0"]) + params["bg0"] + x @ params["wl0"] + params["bl0"]
    x = bn_relu(h, 0)
    for i in range(num_layers - 1):
        h = a_hat @ (x @ params["wg"][i]) + params["bg"][i] + x @ params["wl"][i] + params["bl"][i]
        x = bn_relu(h, i + 1)
    return x @ params["wp"] + params["bp"]


def build_normalized_adjacency(edge_index, num_nodes):
    """Dense A_hat = D^-1/2 (A + I) D^-1/2 matching PyG gcn_norm (duplicate edges add,
    self loops only added for nodes that lack one)."""
    src, dst = edge_index[0], edge_index[1]
    a = jnp.zeros((num_nodes, num_nodes), jnp.float32)
    a = a.at[dst, src].add(1.0)
    diag = jnp.diagonal(a)
    a = a + jnp.diag(jnp.where(diag > 0, 0.0, 1.0))
    deg = a.sum(axis=1)
    d_inv_sqrt = jnp.where(deg > 0, jax.lax.rsqrt(deg), 0.0)
    return a * d_inv_sqrt[:, None] * d_inv_sqrt[None, :]


def init_params(key, in_channels, hidden, out_channels, num_layers):
    ks = jax.random.split(key, 16)
    s = 0.1
    L1 = num_layers - 1
    return {
        "wg0": s * jax.random.normal(ks[0], (in_channels, hidden), jnp.float32),
        "bg0": s * jax.random.normal(ks[1], (1, hidden), jnp.float32),
        "wl0": s * jax.random.normal(ks[2], (in_channels, hidden), jnp.float32),
        "bl0": s * jax.random.normal(ks[3], (1, hidden), jnp.float32),
        "wg": s * jax.random.normal(ks[4], (L1, hidden, hidden), jnp.float32),
        "bg": s * jax.random.normal(ks[5], (L1, hidden), jnp.float32),
        "wl": s * jax.random.normal(ks[6], (L1, hidden, hidden), jnp.float32),
        "bl": s * jax.random.normal(ks[7], (L1, hidden), jnp.float32),
        "bn_gamma": 1.0 + s * jax.random.normal(ks[8], (num_layers, hidden), jnp.float32),
        "bn_beta": s * jax.random.normal(ks[9], (num_layers, hidden), jnp.float32),
        "bn_mean": s * jax.random.normal(ks[10], (num_layers, hidden), jnp.float32),
        "bn_var": 1.0 + 0.1 * jax.nn.softplus(
            jax.random.normal(ks[11], (num_layers, hidden), jnp.float32)),
        "wp": s * jax.random.normal(ks[12], (hidden, out_channels), jnp.float32),
        "bp": s * jax.random.normal(ks[13], (1, out_channels), jnp.float32),
    }


if __name__ == "__main__":
    N, E = 64, 256
    in_channels, hidden, out_channels, num_layers = 16, 32, 8, 3

    key = jax.random.PRNGKey(0)
    k_x, k_e, k_p, k_x2, k_e2 = jax.random.split(key, 5)

    x = jax.random.normal(k_x, (N, in_channels), jnp.float32)
    edge_index = jax.random.randint(k_e, (2, E), 0, N, dtype=jnp.int32)
    a_hat = build_normalized_adjacency(edge_index, N)
    params = init_params(k_p, in_channels, hidden, out_channels, num_layers)

    ref = mpnn_reference(a_hat, x, params, num_layers)

    # fused (A_hat resident, manual overlapped DMA) path — chosen automatically here
    out_fused = jax.block_until_ready(mpnn_forward(a_hat, x, params, num_layers))
    assert out_fused.shape == (N, out_channels)
    assert jnp.allclose(out_fused, ref, atol=5e-2, rtol=5e-2), \
        float(jnp.max(jnp.abs(out_fused - ref)))

    # tiled / streaming path (forced, auto tiles) on the same graph
    out_tiled = jax.block_until_ready(
        mpnn_forward(a_hat, x, params, num_layers, force_tiled=True))
    assert jnp.allclose(out_tiled, ref, atol=5e-2, rtol=5e-2), \
        float(jnp.max(jnp.abs(out_tiled - ref)))

    # second graph exercising a multi-tile (2x2) grid with accumulation over col blocks
    N2, E2 = 200, 1200
    x2 = jax.random.normal(k_x2, (N2, in_channels), jnp.float32)
    e2 = jax.random.randint(k_e2, (2, E2), 0, N2, dtype=jnp.int32)
    a2 = build_normalized_adjacency(e2, N2)
    ref2 = mpnn_reference(a2, x2, params, num_layers)
    out2 = jax.block_until_ready(
        mpnn_forward(a2, x2, params, num_layers, force_tiled=True,
                     row_tile=128, col_tile=128))
    assert out2.shape == (N2, out_channels)
    assert jnp.allclose(out2, ref2, atol=5e-2, rtol=5e-2), \
        float(jnp.max(jnp.abs(out2 - ref2)))

    # same graph with automatic (large) tile selection
    out3 = jax.block_until_ready(
        mpnn_forward(a2, x2, params, num_layers, force_tiled=True))
    assert jnp.allclose(out3, ref2, atol=5e-2, rtol=5e-2), \
        float(jnp.max(jnp.abs(out3 - ref2)))

    print("KERNEL_OK")
</pallas_src>

<mosaic_0001>
module attributes {stable_mosaic.version = 11 : i64} {
  func.func @mpnn_fused_kernel(%arg0: memref<128x128xbf16, #tpu.memory_space<any>>, %arg1: memref<128x128xbf16, #tpu.memory_space<vmem>>, %arg2: memref<128x256xbf16, #tpu.memory_space<vmem>>, %arg3: memref<1x128xf32, #tpu.memory_space<vmem>>, %arg4: memref<2x128x256xbf16, #tpu.memory_space<vmem>>, %arg5: memref<2x128xf32, #tpu.memory_space<vmem>>, %arg6: memref<3x128xf32, #tpu.memory_space<vmem>>, %arg7: memref<3x128xf32, #tpu.memory_space<vmem>>, %arg8: memref<128x128xbf16, #tpu.memory_space<vmem>>, %arg9: memref<1x128xf32, #tpu.memory_space<vmem>>, %arg10: memref<128x128xf32, #tpu.memory_space<vmem>>, %arg11: memref<128x128xbf16, #tpu.memory_space<vmem>>, %arg12: memref<1x!tpu.dma_semaphore, #tpu.memory_space<semaphore_mem>>) attributes {dimension_semantics = [], scalar_prefetch = 0 : i64, scratch_operands = 2 : i64, tpu.core_type = #tpu.core_type<tc>} {
    %c0_i32 = arith.constant 0 : i32
    %0 = tpu.memref_slice %arg12[%c0_i32] : memref<1x!tpu.dma_semaphore, #tpu.memory_space<semaphore_mem>> -> memref<1x!tpu.dma_semaphore, #tpu.memory_space<semaphore_mem>>
    %1 = tpu.memref_squeeze %0 : memref<1x!tpu.dma_semaphore, #tpu.memory_space<semaphore_mem>> -> memref<!tpu.dma_semaphore, #tpu.memory_space<semaphore_mem>>
    tpu.enqueue_dma source(%arg0 : memref<128x128xbf16, #tpu.memory_space<any>>) target(%arg11 : memref<128x128xbf16, #tpu.memory_space<vmem>>) target_semaphore(%1 : memref<!tpu.dma_semaphore, #tpu.memory_space<semaphore_mem>>)
    %c0 = arith.constant 0 : index
    %c0_0 = arith.constant 0 : index
    %2 = vector.load %arg1[%c0, %c0_0] : memref<128x128xbf16, #tpu.memory_space<vmem>>, vector<128x128xbf16>
    %c0_1 = arith.constant 0 : index
    %c0_2 = arith.constant 0 : index
    %3 = vector.load %arg2[%c0_1, %c0_2] : memref<128x256xbf16, #tpu.memory_space<vmem>>, vector<128x256xbf16>
    %cst = arith.constant dense<0.000000e+00> : vector<128x256xf32>
    %4 = tpu.matmul %2, %3, %cst {dimension_numbers = #tpu.dot_dimension_numbers<[1], [0], [0], [1], [0, 0, 1, 1], [], []>} : vector<128x128xbf16>, vector<128x256xbf16>, vector<128x256xf32> -> vector<128x256xf32>
    %c0_i32_3 = arith.constant 0 : i32
    %5 = tpu.memref_slice %arg12[%c0_i32_3] : memref<1x!tpu.dma_semaphore, #tpu.memory_space<semaphore_mem>> -> memref<1x!tpu.dma_semaphore, #tpu.memory_space<semaphore_mem>>
    %6 = tpu.memref_squeeze %5 : memref<1x!tpu.dma_semaphore, #tpu.memory_space<semaphore_mem>> -> memref<!tpu.dma_semaphore, #tpu.memory_space<semaphore_mem>>
    tpu.wait_dma2 semaphore(%6 : memref<!tpu.dma_semaphore, #tpu.memory_space<semaphore_mem>>) src(%arg0 : memref<128x128xbf16, #tpu.memory_space<any>>) dst(%arg11 : memref<128x128xbf16, #tpu.memory_space<vmem>>)
    %c0_4 = arith.constant 0 : index
    %c0_5 = arith.constant 0 : index
    %7 = vector.load %arg11[%c0_4, %c0_5] : memref<128x128xbf16, #tpu.memory_space<vmem>>, vector<128x128xbf16>
    %c0_6 = arith.constant 0 : index
    %c0_7 = arith.constant 0 : index
    %8 = vector.load %arg3[%c0_6, %c0_7] : memref<1x128xf32, #tpu.memory_space<vmem>>, vector<1x128xf32>
    %9 = vector.extract_strided_slice %4 {offsets = [0, 0], sizes = [128, 128], strides = [1, 1]} : vector<128x256xf32> to vector<128x128xf32>
    %10 = vector.extract_strided_slice %4 {offsets = [0, 128], sizes = [128, 128], strides = [1, 1]} : vector<128x256xf32> to vector<128x128xf32>
    %11 = arith.truncf %9 : vector<128x128xf32> to vector<128x128xbf16>
    %cst_8 = arith.constant dense<0.000000e+00> : vector<128x128xf32>
    %12 = tpu.matmul %7, %11, %cst_8 {dimension_numbers = #tpu.dot_dimension_numbers<[1], [0], [0], [1], [0, 0, 1, 1], [], []>} : vector<128x128xbf16>, vector<128x128xbf16>, vector<128x128xf32> -> vector<128x128xf32>
    %13 = arith.addf %12, %10 : vector<128x128xf32>
    %14 = vector.broadcast %8 : vector<1x128xf32> to vector<128x128xf32>
    %15 = arith.addf %13, %14 : vector<128x128xf32>
    %c0_9 = arith.constant 0 : index
    %c0_10 = arith.constant 0 : index
    %16 = vector.load %arg6[%c0_9, %c0_10] : memref<3x128xf32, #tpu.memory_space<vmem>>, vector<1x128xf32>
    %17 = vector.broadcast %16 : vector<1x128xf32> to vector<128x128xf32>
    %18 = arith.mulf %15, %17 : vector<128x128xf32>
    %c0_11 = arith.constant 0 : index
    %c0_12 = arith.constant 0 : index
    %19 = vector.load %arg7[%c0_11, %c0_12] : memref<3x128xf32, #tpu.memory_space<vmem>>, vector<1x128xf32>
    %20 = vector.broadcast %19 : vector<1x128xf32> to vector<128x128xf32>
    %21 = arith.addf %18, %20 : vector<128x128xf32>
    %cst_13 = arith.constant 0.000000e+00 : f32
    %22 = vector.broadcast %cst_13 : f32 to vector<128x128xf32>
    %23 = arith.maximumf %21, %22 : vector<128x128xf32>
    %24 = arith.truncf %23 : vector<128x128xf32> to vector<128x128xbf16>
    %c0_14 = arith.constant 0 : index
    %c0_15 = arith.constant 0 : index
    %c0_16 = arith.constant 0 : index
    %25 = vector.load %arg4[%c0_14, %c0_15, %c0_16] : memref<2x128x256xbf16, #tpu.memory_space<vmem>>, vector<1x128x256xbf16>
    %26 = vector.shape_cast %25 : vector<1x128x256xbf16> to vector<128x256xbf16>
    %cst_17 = arith.constant dense<0.000000e+00> : vector<128x256xf32>
    %27 = tpu.matmul %24, %26, %cst_17 {dimension_numbers = #tpu.dot_dimension_numbers<[1], [0], [0], [1], [0, 0, 1, 1], [], []>} : vector<128x128xbf16>, vector<128x256xbf16>, vector<128x256xf32> -> vector<128x256xf32>
    %c0_18 = arith.constant 0 : index
    %c0_19 = arith.constant 0 : index
    %28 = vector.load %arg5[%c0_18, %c0_19] : memref<2x128xf32, #tpu.memory_space<vmem>>, vector<1x128xf32>
    %29 = vector.extract_strided_slice %27 {offsets = [0, 0], sizes = [128, 128], strides = [1, 1]} : vector<128x256xf32> to vector<128x128xf32>
    %30 = vector.extract_strided_slice %27 {offsets = [0, 128], sizes = [128, 128], strides = [1, 1]} : vector<128x256xf32> to vector<128x128xf32>
    %31 = arith.truncf %29 : vector<128x128xf32> to vector<128x128xbf16>
    %cst_20 = arith.constant dense<0.000000e+00> : vector<128x128xf32>
    %32 = tpu.matmul %7, %31, %cst_20 {dimension_numbers = #tpu.dot_dimension_numbers<[1], [0], [0], [1], [0, 0, 1, 1], [], []>} : vector<128x128xbf16>, vector<128x128xbf16>, vector<128x128xf32> -> vector<128x128xf32>
    %33 = arith.addf %32, %30 : vector<128x128xf32>
    %34 = vector.broadcast %28 : vector<1x128xf32> to vector<128x128xf32>
    %35 = arith.addf %33, %34 : vector<128x128xf32>
    %c1 = arith.constant 1 : index
    %c0_21 = arith.constant 0 : index
    %36 = vector.load %arg6[%c1, %c0_21] : memref<3x128xf32, #tpu.memory_space<vmem>>, vector<1x128xf32>
    %37 = vector.broadcast %36 : vector<1x128xf32> to vector<128x128xf32>
    %38 = arith.mulf %35, %37 : vector<128x128xf32>
    %c1_22 = arith.constant 1 : index
    %c0_23 = arith.constant 0 : index
    %39 = vector.load %arg7[%c1_22, %c0_23] : memref<3x128xf32, #tpu.memory_space<vmem>>, vector<1x128xf32>
    %40 = vector.broadcast %39 : vector<1x128xf32> to vector<128x128xf32>
    %41 = arith.addf %38, %40 : vector<128x128xf32>
    %cst_24 = arith.constant 0.000000e+00 : f32
    %42 = vector.broadcast %cst_24 : f32 to vector<128x128xf32>
    %43 = arith.maximumf %41, %42 : vector<128x128xf32>
    %44 = arith.truncf %43 : vector<128x128xf32> to vector<128x128xbf16>
    %c1_25 = arith.constant 1 : index
    %c0_26 = arith.constant 0 : index
    %c0_27 = arith.constant 0 : index
    %45 = vector.load %arg4[%c1_25, %c0_26, %c0_27] : memref<2x128x256xbf16, #tpu.memory_space<vmem>>, vector<1x128x256xbf16>
    %46 = vector.shape_cast %45 : vector<1x128x256xbf16> to vector<128x256xbf16>
    %cst_28 = arith.constant dense<0.000000e+00> : vector<128x256xf32>
    %47 = tpu.matmul %44, %46, %cst_28 {dimension_numbers = #tpu.dot_dimension_numbers<[1], [0], [0], [1], [0, 0, 1, 1], [], []>} : vector<128x128xbf16>, vector<128x256xbf16>, vector<128x256xf32> -> vector<128x256xf32>
    %c1_29 = arith.constant 1 : index
    %c0_30 = arith.constant 0 : index
    %48 = vector.load %arg5[%c1_29, %c0_30] : memref<2x128xf32, #tpu.memory_space<vmem>>, vector<1x128xf32>
    %49 = vector.extract_strided_slice %47 {offsets = [0, 0], sizes = [128, 128], strides = [1, 1]} : vector<128x256xf32> to vector<128x128xf32>
    %50 = vector.extract_strided_slice %47 {offsets = [0, 128], sizes = [128, 128], strides = [1, 1]} : vector<128x256xf32> to vector<128x128xf32>
    %51 = arith.truncf %49 : vector<128x128xf32> to vector<128x128xbf16>
    %cst_31 = arith.constant dense<0.000000e+00> : vector<128x128xf32>
    %52 = tpu.matmul %7, %51, %cst_31 {dimension_numbers = #tpu.dot_dimension_numbers<[1], [0], [0], [1], [0, 0, 1, 1], [], []>} : vector<128x128xbf16>, vector<128x128xbf16>, vector<128x128xf32> -> vector<128x128xf32>
    %53 = arith.addf %52, %50 : vector<128x128xf32>
    %54 = vector.broadcast %48 : vector<1x128xf32> to vector<128x128xf32>
    %55 = arith.addf %53, %54 : vector<128x128xf32>
    %c2 = arith.constant 2 : index
    %c0_32 = arith.constant 0 : index
    %56 = vector.load %arg6[%c2, %c0_32] : memref<3x128xf32, #tpu.memory_space<vmem>>, vector<1x128xf32>
    %57 = vector.broadcast %56 : vector<1x128xf32> to vector<128x128xf32>
    %58 = arith.mulf %55, %57 : vector<128x128xf32>
    %c2_33 = arith.constant 2 : index
    %c0_34 = arith.constant 0 : index
    %59 = vector.load %arg7[%c2_33, %c0_34] : memref<3x128xf32, #tpu.memory_space<vmem>>, vector<1x128xf32>
    %60 = vector.broadcast %59 : vector<1x128xf32> to vector<128x128xf32>
    %61 = arith.addf %58, %60 : vector<128x128xf32>
    %cst_35 = arith.constant 0.000000e+00 : f32
    %62 = vector.broadcast %cst_35 : f32 to vector<128x128xf32>
    %63 = arith.maximumf %61, %62 : vector<128x128xf32>
    %64 = arith.truncf %63 : vector<128x128xf32> to vector<128x128xbf16>
    %c0_36 = arith.constant 0 : index
    %c0_37 = arith.constant 0 : index
    %65 = vector.load %arg8[%c0_36, %c0_37] : memref<128x128xbf16, #tpu.memory_space<vmem>>, vector<128x128xbf16>
    %cst_38 = arith.constant dense<0.000000e+00> : vector<128x128xf32>
    %66 = tpu.matmul %64, %65, %cst_38 {dimension_numbers = #tpu.dot_dimension_numbers<[1], [0], [0], [1], [0, 0, 1, 1], [], []>} : vector<128x128xbf16>, vector<128x128xbf16>, vector<128x128xf32> -> vector<128x128xf32>
    %c0_39 = arith.constant 0 : index
    %c0_40 = arith.constant 0 : index
    %67 = vector.load %arg9[%c0_39, %c0_40] : memref<1x128xf32, #tpu.memory_space<vmem>>, vector<1x128xf32>
    %68 = vector.broadcast %67 : vector<1x128xf32> to vector<128x128xf32>
    %69 = arith.addf %66, %68 : vector<128x128xf32>
    %c0_41 = arith.constant 0 : index
    %c0_42 = arith.constant 0 : index
    %70 = vector.load %arg10[%c0_41, %c0_42] : memref<128x128xf32, #tpu.memory_space<vmem>>, vector<128x128xf32>
    tpu.vector_store %arg10[%c0_41, %c0_42], %69 {strides = array<i32>} : memref<128x128xf32, #tpu.memory_space<vmem>>, vector<128x128xf32>,
    return
  }
}

</mosaic_0001>

<llo_original>
// kernel: tpu_custom_call.1
$region0: #{tpu_custom_call.1}
  #allocation0 [shape = 'u32[]', space=smem, size = 0x4, offset = 0x4, fixed_abs, tag = 'smem constant byte address 0x4 - core index']
  #allocation1 [shape = 'u32[72,128]{1,0:T(1,128)}', space=vmem, size = 0x9000, scoped, tag = 'internal scratch']
  #allocation2 [shape = 'bf16[128,128]{1,0:T(8,128)(2,1)}', space=vmem, size = 0x8000, scoped, tag = 'scratch operand']
  #allocation3 [shape = 's32[1]{0}', space=sflag, size = 0x4, scoped, tag = 'scratch operand']
  #allocation16 [shape = 's32[]', space=sflag, size = 0x4, offset = 0, fixed_abs, tag = 'sflag constant byte address 0x0 - dummy sync flag']
  #allocation17 [shape = 's32[]', space=sflag, size = 0x4, offset = 0, fixed_abs, tag = 'sflag constant byte address 0x0 - dummy sync flag']
  #allocation18 [shape = 'u32[]', space=smem, size = 0x4, offset = 0x44, fixed_abs, tag = 'smem constant byte address 0x44 - assertion arg 0']
  #allocation19 [shape = 'u32[]', space=smem, size = 0x4, offset = 0x48, fixed_abs, tag = 'smem constant byte address 0x48 - assertion arg 1']
  %s0 = inlined_call_operand.hbm [shape: bf16[128,128], index: 0, kind: input, shape index: {}]
  %s1 = inlined_call_operand.hbm [shape: bf16[128,128], index: 1, kind: input, shape index: {}]
  %s2 = inlined_call_operand.hbm [shape: bf16[128,256], index: 2, kind: input, shape index: {}]
  %s3 = inlined_call_operand.vmem [shape: f32[1,128], index: 3, kind: input, shape index: {}]
  %s4 = inlined_call_operand.hbm [shape: bf16[2,128,256], index: 4, kind: input, shape index: {}]
  %s5 = inlined_call_operand.hbm [shape: f32[2,128], index: 5, kind: input, shape index: {}]
  %s6 = inlined_call_operand.vmem [shape: f32[3,128], index: 6, kind: input, shape index: {}]
  %s7 = inlined_call_operand.hbm [shape: f32[3,128], index: 7, kind: input, shape index: {}]
  %s8 = inlined_call_operand.hbm [shape: bf16[128,128], index: 8, kind: input, shape index: {}]
  %s9 = inlined_call_operand.vmem [shape: f32[1,128], index: 9, kind: input, shape index: {}]
  %s10 = inlined_call_operand.hbm [shape: f32[128,128], index: 10, kind: output, shape index: {}]
  %s11 = sld [smem:[#allocation0]]
  $region74: #{tpu_custom_call.1} parent=0
    _
  %s13 = ssub.s32 1, %s11
  %s14 = scalar_select 0, %s13, %s11
  $region1: #{tpu_custom_call.1} parent=0
    #allocation4 [shape = 'u8[32768]{0}', space=vmem, size = 0x8000, scoped, tag = 'input window, operand 1, single buffered']
    #allocation5 [shape = 's32[1]{0}', space=sflag, size = 0x4, scoped, tag = 'scoped memory for tpu_custom_call.1']
    #allocation6 [shape = 's32[1]{0}', space=sflag, size = 0x4, scoped, tag = 'scoped memory for tpu_custom_call.1']
    #allocation7 [shape = 'u8[65536]{0}', space=vmem, size = 0x10000, scoped, tag = 'input window, operand 2, single buffered']
    #allocation8 [shape = 's32[1]{0}', space=sflag, size = 0x4, scoped, tag = 'scoped memory for tpu_custom_call.1']
    #allocation9 [shape = 'u8[131072]{0}', space=vmem, size = 0x20000, scoped, tag = 'input window, operand 4, single buffered']
    #allocation10 [shape = 'u8[1024]{0}', space=vmem, size = 0x400, scoped, tag = 'input window, operand 5, single buffered']
    #allocation11 [shape = 's32[1]{0}', space=sflag, size = 0x4, scoped, tag = 'scoped memory for tpu_custom_call.1']
    #allocation12 [shape = 'u8[2048]{0}', space=vmem, size = 0x800, scoped, tag = 'input window, operand 7, single buffered']
    #allocation13 [shape = 'u8[32768]{0}', space=vmem, size = 0x8000, scoped, tag = 'input window, operand 8, single buffered']
    #allocation14 [shape = 's32[1]{0}', space=sflag, size = 0x4, scoped, tag = 'scoped memory for tpu_custom_call.1']
    #allocation15 [shape = 'u8[65536]{0}', space=vmem, size = 0x10000, scoped, tag = 'output window, operand 0, single buffered']
    %15 = vsyncpa [#allocation5], 0
    %16 = vsyncpa [#allocation8], 0
    %17 = vsyncpa [#allocation11], 0
    %18 = vsyncpa [#allocation14], 0
    %19 = vsyncpa [#allocation6], 0
    // Predicated region
    $region2: #{tpu_custom_call.1} parent=1 // pred_check
      _
    $region3: #{tpu_custom_call.1} parent=1 // pred_check_branch
      %21 = sbr.rel (0) target = $region5
    $region4: #{tpu_custom_call.1} parent=1 // pred_region
      %23 = vsyncadd [#allocation5], 0
      %s24 = sshll.u32 %s1, 4
      %s25 = int_to_ptr.hbm [resolvable:$true] %s24
      %s26 = sshll.u32 [#allocation4], 4
      %s27 = int_to_ptr.vmem [resolvable:$true] %s26
      %32 = dma.hbm_to_vmem [thread:$0]  %s25, 1024, %s27, [#allocation5], 64, 64, 4
    $region5: #{tpu_custom_call.1} parent=1 // pred_fallthru
      _
    // Predicated region
    $region6: #{tpu_custom_call.1} parent=1 // pred_check
      _
    $region7: #{tpu_custom_call.1} parent=1 // pred_check_branch
      %34 = sbr.rel (0) target = $region9
    $region8: #{tpu_custom_call.1} parent=1 // pred_region
      %36 = vsyncadd [#allocation8], 0
      %s37 = sshll.u32 %s2, 4
      %s38 = int_to_ptr.hbm [resolvable:$true] %s37
      %s39 = sshll.u32 [#allocation7], 4
      %s40 = int_to_ptr.vmem [resolvable:$true] %s39
      %45 = dma.hbm_to_vmem [thread:$0]  %s38, 2048, %s40, [#allocation8], 128, 128, 8
    $region9: #{tpu_custom_call.1} parent=1 // pred_fallthru
      _
    // Predicated region
    $region10: #{tpu_custom_call.1} parent=1 // pred_check
      _
    $region11: #{tpu_custom_call.1} parent=1 // pred_check_branch
      %47 = sbr.rel (0) target = $region13
    $region12: #{tpu_custom_call.1} parent=1 // pred_region
      _
    $region13: #{tpu_custom_call.1} parent=1 // pred_fallthru
      _
    // Predicated region
    $region14: #{tpu_custom_call.1} parent=1 // pred_check
      _
    $region15: #{tpu_custom_call.1} parent=1 // pred_check_branch
      %49 = sbr.rel (0) target = $region17
    $region16: #{tpu_custom_call.1} parent=1 // pred_region
      %51 = vsyncadd [#allocation8], 0
      %s52 = sshll.u32 %s4, 4
      %s53 = int_to_ptr.hbm [resolvable:$true] %s52
      %s54 = sshll.u32 [#allocation9], 4
      %s55 = int_to_ptr.vmem [resolvable:$true] %s54
      %60 = dma.hbm_to_vmem [thread:$0]  %s53, 4096, %s55, [#allocation8], 128, 128, 8
    $region17: #{tpu_custom_call.1} parent=1 // pred_fallthru
      _
    // Predicated region
    $region18: #{tpu_custom_call.1} parent=1 // pred_check
      _
    $region19: #{tpu_custom_call.1} parent=1 // pred_check_branch
      %62 = sbr.rel (0) target = $region21
    $region20: #{tpu_custom_call.1} parent=1 // pred_region
      %64 = vsyncadd [#allocation11], 0
      %s66 = sshll.u32 %s5, 4
      %s67 = int_to_ptr.hbm [resolvable:$true] %s66
      %s68 = sshll.u32 [#allocation10], 4
      %s69 = int_to_ptr.vmem [resolvable:$true] %s68
      %71 = dma.hbm_to_vmem [thread:$0]  %s67, 32, %s69, [#allocation11]
    $region21: #{tpu_custom_call.1} parent=1 // pred_fallthru
      _
    // Predicated region
    $region22: #{tpu_custom_call.1} parent=1 // pred_check
      _
    $region23: #{tpu_custom_call.1} parent=1 // pred_check_branch
      %73 = sbr.rel (0) target = $region25
    $region24: #{tpu_custom_call.1} parent=1 // pred_region
      _
    $region25: #{tpu_custom_call.1} parent=1 // pred_fallthru
      _
    // Predicated region
    $region26: #{tpu_custom_call.1} parent=1 // pred_check
      _
    $region27: #{tpu_custom_call.1} parent=1 // pred_check_branch
      %75 = sbr.rel (0) target = $region29
    $region28: #{tpu_custom_call.1} parent=1 // pred_region
      %77 = vsyncadd [#allocation11], 0
      %s79 = sshll.u32 %s7, 4
      %s80 = int_to_ptr.hbm [resolvable:$true] %s79
      %s81 = sshll.u32 [#allocation12], 4
      %s82 = int_to_ptr.vmem [resolvable:$true] %s81
      %84 = dma.hbm_to_vmem [thread:$0]  %s80, 64, %s82, [#allocation11]
    $region29: #{tpu_custom_call.1} parent=1 // pred_fallthru
      _
    // Predicated region
    $region30: #{tpu_custom_call.1} parent=1 // pred_check
      _
    $region31: #{tpu_custom_call.1} parent=1 // pred_check_branch
      %86 = sbr.rel (0) target = $region33
    $region32: #{tpu_custom_call.1} parent=1 // pred_region
      %88 = vsyncadd [#allocation14], 0
      %s89 = sshll.u32 %s8, 4
      %s90 = int_to_ptr.hbm [resolvable:$true] %s89
      %s91 = sshll.u32 [#allocation13], 4
      %s92 = int_to_ptr.vmem [resolvable:$true] %s91
      %97 = dma.hbm_to_vmem [thread:$0]  %s90, 1024, %s92, [#allocation14], 64, 64, 4
    $region33: #{tpu_custom_call.1} parent=1 // pred_fallthru
      _
    // Predicated region
    $region34: #{tpu_custom_call.1} parent=1 // pred_check
      _
    $region35: #{tpu_custom_call.1} parent=1 // pred_check_branch
      %99 = sbr.rel (0) target = $region37
    $region36: #{tpu_custom_call.1} parent=1 // pred_region
      _
    $region37: #{tpu_custom_call.1} parent=1 // pred_fallthru
      _
    // Predicated region
    $region38: #{tpu_custom_call.1} parent=1 // pred_check
      _
    $region39: #{tpu_custom_call.1} parent=1 // pred_check_branch
      %101 = sbr.rel (0) target = $region41
    $region40: #{tpu_custom_call.1} parent=1 // pred_region
      %103 = dma.done [#allocation5], 1024
    $region41: #{tpu_custom_call.1} parent=1 // pred_fallthru
      _
    // Predicated region
    $region42: #{tpu_custom_call.1} parent=1 // pred_check
      _
    $region43: #{tpu_custom_call.1} parent=1 // pred_check_branch
      %105 = sbr.rel (0) target = $region45
    $region44: #{tpu_custom_call.1} parent=1 // pred_region
      %107 = dma.done [#allocation8], 2048
    $region45: #{tpu_custom_call.1} parent=1 // pred_fallthru
      _
    // Predicated region
    $region46: #{tpu_custom_call.1} parent=1 // pred_check
      _
    $region47: #{tpu_custom_call.1} parent=1 // pred_check_branch
      %109 = sbr.rel (0) target = $region49
    $region48: #{tpu_custom_call.1} parent=1 // pred_region
      %111 = dma.done [#allocation8], 4096
    $region49: #{tpu_custom_call.1} parent=1 // pred_fallthru
      _
    // Predicated region
    $region50: #{tpu_custom_call.1} parent=1 // pred_check
      _
    $region51: #{tpu_custom_call.1} parent=1 // pred_check_branch
      %113 = sbr.rel (0) target = $region53
    $region52: #{tpu_custom_call.1} parent=1 // pred_region
      %115 = dma.done [#allocation11], 32
    $region53: #{tpu_custom_call.1} parent=1 // pred_fallthru
      _
    // Predicated region
    $region54: #{tpu_custom_call.1} parent=1 // pred_check
      _
    $region55: #{tpu_custom_call.1} parent=1 // pred_check_branch
      %117 = sbr.rel (0) target = $region57
    $region56: #{tpu_custom_call.1} parent=1 // pred_region
      %119 = dma.done [#allocation11], 64
    $region57: #{tpu_custom_call.1} parent=1 // pred_fallthru
      _
    // Predicated region
    $region58: #{tpu_custom_call.1} parent=1 // pred_check
      _
    $region59: #{tpu_custom_call.1} parent=1 // pred_check_branch
      %121 = sbr.rel (0) target = $region61
    $region60: #{tpu_custom_call.1} parent=1 // pred_region
      %123 = dma.done [#allocation14], 1024
    $region61: #{tpu_custom_call.1} parent=1 // pred_fallthru
      _
    // Predicated region
    $region62: #{tpu_custom_call.1} parent=1 // pred_check
      _
    $region63: #{tpu_custom_call.1} parent=1 // pred_check_branch
      %125 = sbr.rel target = $region65
    $region64: #{tpu_custom_call.1} parent=1 // pred_region
      %126 = sst [smem:[#allocation18]] [#allocation17]
      %127 = sst [smem:[#allocation19]] [#allocation16]
    $region65: #{tpu_custom_call.1} parent=1 // pred_fallthru
      _
    %129 = shalt.err (0)
    %s131 = sshll.u32 %s0, 4
    %s132 = int_to_ptr.hbm [resolvable:$true] %s131
    %s133 = sshll.u32 [#allocation2], 4
    %s134 = int_to_ptr.vmem [resolvable:$true] %s133
    %136 = dma.hbm_to_vmem [thread:$0]  %s132, 1024, %s134, [#allocation3]
    %v137 = vld [vmem:[#allocation4] sm:$0xf]
    %v138 = vld [vmem:[#allocation4 + $0x4] sm:$0xf]
    %v139 = vld [vmem:[#allocation4 + $0x8] sm:$0xf]
    %v140 = vld [vmem:[#allocation4 + $0xc] sm:$0xf]
    %v141 = vld [vmem:[#allocation4 + $0x10] sm:$0xf]
    %v142 = vld [vmem:[#allocation4 + $0x14] sm:$0xf]
    %v143 = vld [vmem:[#allocation4 + $0x18] sm:$0xf]
    %v144 = vld [vmem:[#allocation4 + $0x1c] sm:$0xf]
    %v145 = vld [vmem:[#allocation4 + $0x20] sm:$0xf]
    %v146 = vld [vmem:[#allocation4 + $0x24] sm:$0xf]
    %v147 = vld [vmem:[#allocation4 + $0x28] sm:$0xf]
    %v148 = vld [vmem:[#allocation4 + $0x2c] sm:$0xf]
    %v149 = vld [vmem:[#allocation4 + $0x30] sm:$0xf]
    %v150 = vld [vmem:[#allocation4 + $0x34] sm:$0xf]
    %v151 = vld [vmem:[#allocation4 + $0x38] sm:$0xf]
    %v152 = vld [vmem:[#allocation4 + $0x3c] sm:$0xf]
    %v153 = vld [vmem:[#allocation7] sm:$0xff]
    %v154 = vld [vmem:[#allocation7 + $0x8] sm:$0xff]
    %v155 = vld [vmem:[#allocation7 + $0x10] sm:$0xff]
    %v156 = vld [vmem:[#allocation7 + $0x18] sm:$0xff]
    %v157 = vld [vmem:[#allocation7 + $0x20] sm:$0xff]
    %v158 = vld [vmem:[#allocation7 + $0x28] sm:$0xff]
    %v159 = vld [vmem:[#allocation7 + $0x30] sm:$0xff]
    %v160 = vld [vmem:[#allocation7 + $0x38] sm:$0xff]
    %v161 = vld [vmem:[#allocation7 + $0x40] sm:$0xff]
    %v162 = vld [vmem:[#allocation7 + $0x48] sm:$0xff]
    %v163 = vld [vmem:[#allocation7 + $0x50] sm:$0xff]
    %v164 = vld [vmem:[#allocation7 + $0x58] sm:$0xff]
    %v165 = vld [vmem:[#allocation7 + $0x60] sm:$0xff]
    %v166 = vld [vmem:[#allocation7 + $0x68] sm:$0xff]
    %v167 = vld [vmem:[#allocation7 + $0x70] sm:$0xff]
    %v168 = vld [vmem:[#allocation7 + $0x78] sm:$0xff]
    %v185 = vunpack.c.l.b16 %v137
    %v186 = vunpack.c.l.b16 %v138
    %v187 = vunpack.c.l.b16 %v139
    %v188 = vunpack.c.l.b16 %v140
    %v189 = vunpack.c.l.b16 %v141
    %v190 = vunpack.c.l.b16 %v142
    %v191 = vunpack.c.l.b16 %v143
    %v192 = vunpack.c.l.b16 %v144
    %v193 = vunpack.c.l.b16 %v145
    %v194 = vunpack.c.l.b16 %v146
    %v195 = vunpack.c.l.b16 %v147
    %v196 = vunpack.c.l.b16 %v148
    %v197 = vunpack.c.l.b16 %v149
    %v198 = vunpack.c.l.b16 %v150
    %v199 = vunpack.c.l.b16 %v151
    %v200 = vunpack.c.l.b16 %v152
    %v201 = vpack.c.b16 %v186, %v185
    %v202 = vpack.c.b16 %v188, %v187
    %v203 = vpack.c.b16 %v190, %v189
    %v204 = vpack.c.b16 %v192, %v191
    %v205 = vpack.c.b16 %v194, %v193
    %v206 = vpack.c.b16 %v196, %v195
    %v207 = vpack.c.b16 %v198, %v197
    %v208 = vpack.c.b16 %v200, %v199
    %v233 = vunpack.c.l.b16 %v153
    %v234 = vunpack.c.h.b16 %v153
    %v235 = vunpack.c.l.b16 %v154
    %v236 = vunpack.c.h.b16 %v154
    %v237 = vunpack.c.l.b16 %v155
    %v238 = vunpack.c.h.b16 %v155
    %v239 = vunpack.c.l.b16 %v156
    %v240 = vunpack.c.h.b16 %v156
    %v241 = vunpack.c.l.b16 %v157
    %v242 = vunpack.c.h.b16 %v157
    %v243 = vunpack.c.l.b16 %v158
    %v244 = vunpack.c.h.b16 %v158
    %v245 = vunpack.c.l.b16 %v159
    %v246 = vunpack.c.h.b16 %v159
    %v247 = vunpack.c.l.b16 %v160
    %v248 = vunpack.c.h.b16 %v160
    %v249 = vunpack.c.l.b16 %v161
    %v250 = vunpack.c.h.b16 %v161
    %v251 = vunpack.c.l.b16 %v162
    %v252 = vunpack.c.h.b16 %v162
    %v253 = vunpack.c.l.b16 %v163
    %v254 = vunpack.c.h.b16 %v163
    %v255 = vunpack.c.l.b16 %v164
    %v256 = vunpack.c.h.b16 %v164
    %v257 = vunpack.c.l.b16 %v165
    %v258 = vunpack.c.h.b16 %v165
    %v259 = vunpack.c.l.b16 %v166
    %v260 = vunpack.c.h.b16 %v166
    %v261 = vunpack.c.l.b16 %v167
    %v262 = vunpack.c.h.b16 %v167
    %v263 = vunpack.c.l.b16 %v168
    %v264 = vunpack.c.h.b16 %v168
    %v265 = vpack.c.b16 %v235, %v233
    %v266 = vpack.c.b16 %v236, %v234
    %v267 = vpack.c.b16 %v239, %v237
    %v268 = vpack.c.b16 %v240, %v238
    %v269 = vpack.c.b16 %v243, %v241
    %v270 = vpack.c.b16 %v244, %v242
    %v271 = vpack.c.b16 %v247, %v245
    %v272 = vpack.c.b16 %v248, %v246
    %v273 = vpack.c.b16 %v251, %v249
    %v274 = vpack.c.b16 %v252, %v250
    %v275 = vpack.c.b16 %v255, %v253
    %v276 = vpack.c.b16 %v256, %v254
    %v277 = vpack.c.b16 %v259, %v257
    %v278 = vpack.c.b16 %v260, %v258
    %v279 = vpack.c.b16 %v263, %v261
    %v280 = vpack.c.b16 %v264, %v262
    %297 = vmatpush.bf16.msra.mxu0 %v279
    %298 = vmatpush.bf16.msra.mxu0 %v277
    %299 = vmatpush.bf16.msra.mxu0 %v275
    %300 = vmatpush.bf16.msra.mxu0 %v273
    %301 = vmatpush.bf16.msra.mxu0 %v271
    %302 = vmatpush.bf16.msra.mxu0 %v269
    %303 = vmatpush.bf16.msra.mxu0 %v267
    %304 = vmatpush.bf16.msra.mxu0 %v265
    %305 = vmatmul.bf16.gmra.mxu0 %v201
    %v306 = vpop.f32.mrf.mxu0
    %v307 = vadd.f32 0.0, %v306
    %v308 = vpop.f32.mrf.mxu0
    %v309 = vadd.f32 0.0, %v308
    %310 = vmatmul.bf16.gmra.mxu0 %v202
    %v311 = vpop.f32.mrf.mxu0
    %v312 = vadd.f32 0.0, %v311
    %v313 = vpop.f32.mrf.mxu0
    %v314 = vadd.f32 0.0, %v313
    %315 = vmatmul.bf16.gmra.mxu0 %v203
    %v316 = vpop.f32.mrf.mxu0
    %v317 = vadd.f32 0.0, %v316
    %v318 = vpop.f32.mrf.mxu0
    %v319 = vadd.f32 0.0, %v318
    %320 = vmatmul.bf16.gmra.mxu0 %v204
    %v321 = vpop.f32.mrf.mxu0
    %v322 = vadd.f32 0.0, %v321
    %v323 = vpop.f32.mrf.mxu0
    %v324 = vadd.f32 0.0, %v323
    %325 = vmatmul.bf16.gmra.mxu0 %v205
    %v326 = vpop.f32.mrf.mxu0
    %v327 = vadd.f32 0.0, %v326
    %v328 = vpop.f32.mrf.mxu0
    %v329 = vadd.f32 0.0, %v328
    %330 = vmatmul.bf16.gmra.mxu0 %v206
    %v331 = vpop.f32.mrf.mxu0
    %v332 = vadd.f32 0.0, %v331
    %v333 = vpop.f32.mrf.mxu0
    %v334 = vadd.f32 0.0, %v333
    %335 = vmatmul.bf16.gmra.mxu0 %v207
    %v336 = vpop.f32.mrf.mxu0
    %v337 = vadd.f32 0.0, %v336
    %v338 = vpop.f32.mrf.mxu0
    %v339 = vadd.f32 0.0, %v338
    %340 = vmatmul.bf16.gmra.mxu0 %v208
    %v341 = vpop.f32.mrf.mxu0
    %v342 = vadd.f32 0.0, %v341
    %v343 = vpop.f32.mrf.mxu0
    %v344 = vadd.f32 0.0, %v343
    %345 = vdwg.mxu0
    %346 = vmatpush.bf16.msra.mxu0 %v280
    %347 = vmatpush.bf16.msra.mxu0 %v278
    %348 = vmatpush.bf16.msra.mxu0 %v276
    %349 = vmatpush.bf16.msra.mxu0 %v274
    %350 = vmatpush.bf16.msra.mxu0 %v272
    %351 = vmatpush.bf16.msra.mxu0 %v270
    %352 = vmatpush.bf16.msra.mxu0 %v268
    %353 = vmatpush.bf16.msra.mxu0 %v266
    %354 = vmatmul.bf16.gmra.mxu0 %v201
    %v355 = vpop.f32.mrf.mxu0
    %v356 = vadd.f32 0.0, %v355
    %v357 = vpop.f32.mrf.mxu0
    %v358 = vadd.f32 0.0, %v357
    %359 = vmatmul.bf16.gmra.mxu0 %v202
    %v360 = vpop.f32.mrf.mxu0
    %v361 = vadd.f32 0.0, %v360
    %v362 = vpop.f32.mrf.mxu0
    %v363 = vadd.f32 0.0, %v362
    %364 = vmatmul.bf16.gmra.mxu0 %v203
    %v365 = vpop.f32.mrf.mxu0
    %v366 = vadd.f32 0.0, %v365
    %v367 = vpop.f32.mrf.mxu0
    %v368 = vadd.f32 0.0, %v367
    %369 = vmatmul.bf16.gmra.mxu0 %v204
    %v370 = vpop.f32.mrf.mxu0
    %v371 = vadd.f32 0.0, %v370
    %v372 = vpop.f32.mrf.mxu0
    %v373 = vadd.f32 0.0, %v372
    %374 = vmatmul.bf16.gmra.mxu0 %v205
    %v375 = vpop.f32.mrf.mxu0
    %v376 = vadd.f32 0.0, %v375
    %v377 = vpop.f32.mrf.mxu0
    %v378 = vadd.f32 0.0, %v377
    %379 = vmatmul.bf16.gmra.mxu0 %v206
    %v380 = vpop.f32.mrf.mxu0
    %v381 = vadd.f32 0.0, %v380
    %v382 = vpop.f32.mrf.mxu0
    %v383 = vadd.f32 0.0, %v382
    %384 = vmatmul.bf16.gmra.mxu0 %v207
    %v385 = vpop.f32.mrf.mxu0
    %v386 = vadd.f32 0.0, %v385
    %v387 = vpop.f32.mrf.mxu0
    %v388 = vadd.f32 0.0, %v387
    %389 = vmatmul.bf16.gmra.mxu0 %v208
    %v390 = vpop.f32.mrf.mxu0
    %v391 = vadd.f32 0.0, %v390
    %v392 = vpop.f32.mrf.mxu0
    %v393 = vadd.f32 0.0, %v392
    %394 = vdwg.mxu0
    %s395 = smul.u32 4, 16
    %s396 = smul.u32 %s395, 1
    %s397 = sshll.u32 %s396, 4
    %398 = dma.done [#allocation3], %s397
    %v399 = vld [vmem:[#allocation2] sm:$0xf]
    %v400 = vld [vmem:[#allocation2 + $0x4] sm:$0xf]
    %v401 = vld [vmem:[#allocation2 + $0x8] sm:$0xf]
    %v402 = vld [vmem:[#allocation2 + $0xc] sm:$0xf]
    %v403 = vld [vmem:[#allocation2 + $0x10] sm:$0xf]
    %v404 = vld [vmem:[#allocation2 + $0x14] sm:$0xf]
    %v405 = vld [vmem:[#allocation2 + $0x18] sm:$0xf]
    %v406 = vld [vmem:[#allocation2 + $0x1c] sm:$0xf]
    %v407 = vld [vmem:[#allocation2 + $0x20] sm:$0xf]
    %v408 = vld [vmem:[#allocation2 + $0x24] sm:$0xf]
    %v409 = vld [vmem:[#allocation2 + $0x28] sm:$0xf]
    %v410 = vld [vmem:[#allocation2 + $0x2c] sm:$0xf]
    %v411 = vld [vmem:[#allocation2 + $0x30] sm:$0xf]
    %v412 = vld [vmem:[#allocation2 + $0x34] sm:$0xf]
    %v413 = vld [vmem:[#allocation2 + $0x38] sm:$0xf]
    %v414 = vld [vmem:[#allocation2 + $0x3c] sm:$0xf]
    %v415 = vld [vmem:[%s3] sm:$0x1]
    %v416 = vpack.c.bf16 %v309, %v307
    %v417 = vpack.c.bf16 %v314, %v312
    %v418 = vpack.c.bf16 %v319, %v317
    %v419 = vpack.c.bf16 %v324, %v322
    %v420 = vpack.c.bf16 %v329, %v327
    %v421 = vpack.c.bf16 %v334, %v332
    %v422 = vpack.c.bf16 %v339, %v337
    %v423 = vpack.c.bf16 %v344, %v342
    %v440 = vunpack.c.l.b16 %v399
    %v441 = vunpack.c.l.b16 %v400
    %v442 = vunpack.c.l.b16 %v401
    %v443 = vunpack.c.l.b16 %v402
    %v444 = vunpack.c.l.b16 %v403
    %v445 = vunpack.c.l.b16 %v404
    %v446 = vunpack.c.l.b16 %v405
    %v447 = vunpack.c.l.b16 %v406
    %v448 = vunpack.c.l.b16 %v407
    %v449 = vunpack.c.l.b16 %v408
    %v450 = vunpack.c.l.b16 %v409
    %v451 = vunpack.c.l.b16 %v410
    %v452 = vunpack.c.l.b16 %v411
    %v453 = vunpack.c.l.b16 %v412
    %v454 = vunpack.c.l.b16 %v413
    %v455 = vunpack.c.l.b16 %v414
    %v456 = vpack.c.b16 %v441, %v440
    %v457 = vpack.c.b16 %v443, %v442
    %v458 = vpack.c.b16 %v445, %v444
    %v459 = vpack.c.b16 %v447, %v446
    %v460 = vpack.c.b16 %v449, %v448
    %v461 = vpack.c.b16 %v451, %v450
    %v462 = vpack.c.b16 %v453, %v452
    %v463 = vpack.c.b16 %v455, %v454
    %472 = vmatpush.bf16.msra.mxu0 %v423
    %473 = vmatpush.bf16.msra.mxu0 %v422
    %474 = vmatpush.bf16.msra.mxu0 %v421
    %475 = vmatpush.bf16.msra.mxu0 %v420
    %476 = vmatpush.bf16.msra.mxu0 %v419
    %477 = vmatpush.bf16.msra.mxu0 %v418
    %478 = vmatpush.bf16.msra.mxu0 %v417
    %479 = vmatpush.bf16.msra.mxu0 %v416
    %480 = vmatmul.bf16.gmra.mxu0 %v456
    %v481 = vpop.f32.mrf.mxu0
    %v482 = vadd.f32 %v356, %v481
    %v483 = vpop.f32.mrf.mxu0
    %v484 = vadd.f32 %v358, %v483
    %485 = vmatmul.bf16.gmra.mxu0 %v457
    %v486 = vpop.f32.mrf.mxu0
    %v487 = vadd.f32 %v361, %v486
    %v488 = vpop.f32.mrf.mxu0
    %v489 = vadd.f32 %v363, %v488
    %490 = vmatmul.bf16.gmra.mxu0 %v458
    %v491 = vpop.f32.mrf.mxu0
    %v492 = vadd.f32 %v366, %v491
    %v493 = vpop.f32.mrf.mxu0
    %v494 = vadd.f32 %v368, %v493
    %495 = vmatmul.bf16.gmra.mxu0 %v459
    %v496 = vpop.f32.mrf.mxu0
    %v497 = vadd.f32 %v371, %v496
    %v498 = vpop.f32.mrf.mxu0
    %v499 = vadd.f32 %v373, %v498
    %500 = vmatmul.bf16.gmra.mxu0 %v460
    %v501 = vpop.f32.mrf.mxu0
    %v502 = vadd.f32 %v376, %v501
    %v503 = vpop.f32.mrf.mxu0
    %v504 = vadd.f32 %v378, %v503
    %505 = vmatmul.bf16.gmra.mxu0 %v461
    %v506 = vpop.f32.mrf.mxu0
    %v507 = vadd.f32 %v381, %v506
    %v508 = vpop.f32.mrf.mxu0
    %v509 = vadd.f32 %v383, %v508
    %510 = vmatmul.bf16.gmra.mxu0 %v462
    %v511 = vpop.f32.mrf.mxu0
    %v512 = vadd.f32 %v386, %v511
    %v513 = vpop.f32.mrf.mxu0
    %v514 = vadd.f32 %v388, %v513
    %515 = vmatmul.bf16.gmra.mxu0 %v463
    %v516 = vpop.f32.mrf.mxu0
    %v517 = vadd.f32 %v391, %v516
    %v518 = vpop.f32.mrf.mxu0
    %v519 = vadd.f32 %v393, %v518
    %520 = vdwg.mxu0
    %v522 = vperm.slane %v415, 0
    %v524 = vadd.f32 %v482, %v522
    %v525 = vadd.f32 %v484, %v522
    %v526 = vadd.f32 %v487, %v522
    %v527 = vadd.f32 %v489, %v522
    %v528 = vadd.f32 %v492, %v522
    %v529 = vadd.f32 %v494, %v522
    %v530 = vadd.f32 %v497, %v522
    %v531 = vadd.f32 %v499, %v522
    %v532 = vadd.f32 %v502, %v522
    %v533 = vadd.f32 %v504, %v522
    %v534 = vadd.f32 %v507, %v522
    %v535 = vadd.f32 %v509, %v522
    %v536 = vadd.f32 %v512, %v522
    %v537 = vadd.f32 %v514, %v522
    %v538 = vadd.f32 %v517, %v522
    %v539 = vadd.f32 %v519, %v522
    %v540 = vld [vmem:[%s6] sm:$0x1]
    %v541 = vperm.slane %v540, 0
    %v542 = vmul.f32 %v524, %v541
    %v543 = vmul.f32 %v525, %v541
    %v544 = vmul.f32 %v526, %v541
    %v545 = vmul.f32 %v527, %v541
    %v546 = vmul.f32 %v528, %v541
    %v547 = vmul.f32 %v529, %v541
    %v548 = vmul.f32 %v530, %v541
    %v549 = vmul.f32 %v531, %v541
    %v550 = vmul.f32 %v532, %v541
    %v551 = vmul.f32 %v533, %v541
    %v552 = vmul.f32 %v534, %v541
    %v553 = vmul.f32 %v535, %v541
    %v554 = vmul.f32 %v536, %v541
    %v555 = vmul.f32 %v537, %v541
    %v556 = vmul.f32 %v538, %v541
    %v557 = vmul.f32 %v539, %v541
    %v558 = vld [vmem:[#allocation12] sm:$0x1]
    %v559 = vperm.slane %v558, 0
    %v560 = vadd.f32 %v542, %v559
    %v561 = vadd.f32 %v543, %v559
    %v562 = vadd.f32 %v544, %v559
    %v563 = vadd.f32 %v545, %v559
    %v564 = vadd.f32 %v546, %v559
    %v565 = vadd.f32 %v547, %v559
    %v566 = vadd.f32 %v548, %v559
    %v567 = vadd.f32 %v549, %v559
    %v568 = vadd.f32 %v550, %v559
    %v569 = vadd.f32 %v551, %v559
    %v570 = vadd.f32 %v552, %v559
    %v571 = vadd.f32 %v553, %v559
    %v572 = vadd.f32 %v554, %v559
    %v573 = vadd.f32 %v555, %v559
    %v574 = vadd.f32 %v556, %v559
    %v575 = vadd.f32 %v557, %v559
    %v576 = vmax.f32 %v560, 0.0
    %v577 = vmax.f32 %v561, 0.0
    %v578 = vmax.f32 %v562, 0.0
    %v579 = vmax.f32 %v563, 0.0
    %v580 = vmax.f32 %v564, 0.0
    %v581 = vmax.f32 %v565, 0.0
    %v582 = vmax.f32 %v566, 0.0
    %v583 = vmax.f32 %v567, 0.0
    %v584 = vmax.f32 %v568, 0.0
    %v585 = vmax.f32 %v569, 0.0
    %v586 = vmax.f32 %v570, 0.0
    %v587 = vmax.f32 %v571, 0.0
    %v588 = vmax.f32 %v572, 0.0
    %v589 = vmax.f32 %v573, 0.0
    %v590 = vmax.f32 %v574, 0.0
    %v591 = vmax.f32 %v575, 0.0
    %v592 = vpack.c.bf16 %v577, %v576
    %v593 = vpack.c.bf16 %v579, %v578
    %v594 = vpack.c.bf16 %v581, %v580
    %v595 = vpack.c.bf16 %v583, %v582
    %v596 = vpack.c.bf16 %v585, %v584
    %v597 = vpack.c.bf16 %v587, %v586
    %v598 = vpack.c.bf16 %v589, %v588
    %v599 = vpack.c.bf16 %v591, %v590
    %v600 = vld [vmem:[#allocation9] sm:$0xff]
    %v601 = vld [vmem:[#allocation9 + $0x8] sm:$0xff]
    %v602 = vld [vmem:[#allocation9 + $0x10] sm:$0xff]
    %v603 = vld [vmem:[#allocation9 + $0x18] sm:$0xff]
    %v604 = vld [vmem:[#allocation9 + $0x20] sm:$0xff]
    %v605 = vld [vmem:[#allocation9 + $0x28] sm:$0xff]
    %v606 = vld [vmem:[#allocation9 + $0x30] sm:$0xff]
    %v607 = vld [vmem:[#allocation9 + $0x38] sm:$0xff]
    %v608 = vld [vmem:[#allocation9 + $0x40] sm:$0xff]
    %v609 = vld [vmem:[#allocation9 + $0x48] sm:$0xff]
    %v610 = vld [vmem:[#allocation9 + $0x50] sm:$0xff]
    %v611 = vld [vmem:[#allocation9 + $0x58] sm:$0xff]
    %v612 = vld [vmem:[#allocation9 + $0x60] sm:$0xff]
    %v613 = vld [vmem:[#allocation9 + $0x68] sm:$0xff]
    %v614 = vld [vmem:[#allocation9 + $0x70] sm:$0xff]
    %v615 = vld [vmem:[#allocation9 + $0x78] sm:$0xff]
    %v632 = vunpack.c.l.b16 %v600
    %v633 = vunpack.c.h.b16 %v600
    %v634 = vunpack.c.l.b16 %v601
    %v635 = vunpack.c.h.b16 %v601
    %v636 = vunpack.c.l.b16 %v602
    %v637 = vunpack.c.h.b16 %v602
    %v638 = vunpack.c.l.b16 %v603
    %v639 = vunpack.c.h.b16 %v603
    %v640 = vunpack.c.l.b16 %v604
    %v641 = vunpack.c.h.b16 %v604
    %v642 = vunpack.c.l.b16 %v605
    %v643 = vunpack.c.h.b16 %v605
    %v644 = vunpack.c.l.b16 %v606
    %v645 = vunpack.c.h.b16 %v606
    %v646 = vunpack.c.l.b16 %v607
    %v647 = vunpack.c.h.b16 %v607
    %v648 = vunpack.c.l.b16 %v608
    %v649 = vunpack.c.h.b16 %v608
    %v650 = vunpack.c.l.b16 %v609
    %v651 = vunpack.c.h.b16 %v609
    %v652 = vunpack.c.l.b16 %v610
    %v653 = vunpack.c.h.b16 %v610
    %v654 = vunpack.c.l.b16 %v611
    %v655 = vunpack.c.h.b16 %v611
    %v656 = vunpack.c.l.b16 %v612
    %v657 = vunpack.c.h.b16 %v612
    %v658 = vunpack.c.l.b16 %v613
    %v659 = vunpack.c.h.b16 %v613
    %v660 = vunpack.c.l.b16 %v614
    %v661 = vunpack.c.h.b16 %v614
    %v662 = vunpack.c.l.b16 %v615
    %v663 = vunpack.c.h.b16 %v615
    %v664 = vpack.c.b16 %v634, %v632
    %v665 = vpack.c.b16 %v635, %v633
    %v666 = vpack.c.b16 %v638, %v636
    %v667 = vpack.c.b16 %v639, %v637
    %v668 = vpack.c.b16 %v642, %v640
    %v669 = vpack.c.b16 %v643, %v641
    %v670 = vpack.c.b16 %v646, %v644
    %v671 = vpack.c.b16 %v647, %v645
    %v672 = vpack.c.b16 %v650, %v648
    %v673 = vpack.c.b16 %v651, %v649
    %v674 = vpack.c.b16 %v654, %v652
    %v675 = vpack.c.b16 %v655, %v653
    %v676 = vpack.c.b16 %v658, %v656
    %v677 = vpack.c.b16 %v659, %v657
    %v678 = vpack.c.b16 %v662, %v660
    %v679 = vpack.c.b16 %v663, %v661
    %696 = vmatpush.bf16.msra.mxu0 %v678
    %697 = vmatpush.bf16.msra.mxu0 %v676
    %698 = vmatpush.bf16.msra.mxu0 %v674
    %699 = vmatpush.bf16.msra.mxu0 %v672
    %700 = vmatpush.bf16.msra.mxu0 %v670
    %701 = vmatpush.bf16.msra.mxu0 %v668
    %702 = vmatpush.bf16.msra.mxu0 %v666
    %703 = vmatpush.bf16.msra.mxu0 %v664
    %704 = vmatmul.bf16.gmra.mxu0 %v592
    %v705 = vpop.f32.mrf.mxu0
    %v706 = vadd.f32 0.0, %v705
    %v707 = vpop.f32.mrf.mxu0
    %v708 = vadd.f32 0.0, %v707
    %709 = vmatmul.bf16.gmra.mxu0 %v593
    %v710 = vpop.f32.mrf.mxu0
    %v711 = vadd.f32 0.0, %v710
    %v712 = vpop.f32.mrf.mxu0
    %v713 = vadd.f32 0.0, %v712
    %714 = vmatmul.bf16.gmra.mxu0 %v594
    %v715 = vpop.f32.mrf.mxu0
    %v716 = vadd.f32 0.0, %v715
    %v717 = vpop.f32.mrf.mxu0
    %v718 = vadd.f32 0.0, %v717
    %719 = vmatmul.bf16.gmra.mxu0 %v595
    %v720 = vpop.f32.mrf.mxu0
    %v721 = vadd.f32 0.0, %v720
    %v722 = vpop.f32.mrf.mxu0
    %v723 = vadd.f32 0.0, %v722
    %724 = vmatmul.bf16.gmra.mxu0 %v596
    %v725 = vpop.f32.mrf.mxu0
    %v726 = vadd.f32 0.0, %v725
    %v727 = vpop.f32.mrf.mxu0
    %v728 = vadd.f32 0.0, %v727
    %729 = vmatmul.bf16.gmra.mxu0 %v597
    %v730 = vpop.f32.mrf.mxu0
    %v731 = vadd.f32 0.0, %v730
    %v732 = vpop.f32.mrf.mxu0
    %v733 = vadd.f32 0.0, %v732
    %734 = vmatmul.bf16.gmra.mxu0 %v598
    %v735 = vpop.f32.mrf.mxu0
    %v736 = vadd.f32 0.0, %v735
    %v737 = vpop.f32.mrf.mxu0
    %v738 = vadd.f32 0.0, %v737
    %739 = vmatmul.bf16.gmra.mxu0 %v599
    %v740 = vpop.f32.mrf.mxu0
    %v741 = vadd.f32 0.0, %v740
    %v742 = vpop.f32.mrf.mxu0
    %v743 = vadd.f32 0.0, %v742
    %744 = vdwg.mxu0
    %745 = vmatpush.bf16.msra.mxu0 %v679
    %746 = vmatpush.bf16.msra.mxu0 %v677
    %747 = vmatpush.bf16.msra.mxu0 %v675
    %748 = vmatpush.bf16.msra.mxu0 %v673
    %749 = vmatpush.bf16.msra.mxu0 %v671
    %750 = vmatpush.bf16.msra.mxu0 %v669
    %751 = vmatpush.bf16.msra.mxu0 %v667
    %752 = vmatpush.bf16.msra.mxu0 %v665
    %753 = vmatmul.bf16.gmra.mxu0 %v592
    %v754 = vpop.f32.mrf.mxu0
    %v755 = vadd.f32 0.0, %v754
    %v756 = vpop.f32.mrf.mxu0
    %v757 = vadd.f32 0.0, %v756
    %758 = vmatmul.bf16.gmra.mxu0 %v593
    %v759 = vpop.f32.mrf.mxu0
    %v760 = vadd.f32 0.0, %v759
    %v761 = vpop.f32.mrf.mxu0
    %v762 = vadd.f32 0.0, %v761
    %763 = vmatmul.bf16.gmra.mxu0 %v594
    %v764 = vpop.f32.mrf.mxu0
    %v765 = vadd.f32 0.0, %v764
    %v766 = vpop.f32.mrf.mxu0
    %v767 = vadd.f32 0.0, %v766
    %768 = vmatmul.bf16.gmra.mxu0 %v595
    %v769 = vpop.f32.mrf.mxu0
    %v770 = vadd.f32 0.0, %v769
    %v771 = vpop.f32.mrf.mxu0
    %v772 = vadd.f32 0.0, %v771
    %773 = vmatmul.bf16.gmra.mxu0 %v596
    %v774 = vpop.f32.mrf.mxu0
    %v775 = vadd.f32 0.0, %v774
    %v776 = vpop.f32.mrf.mxu0
    %v777 = vadd.f32 0.0, %v776
    %778 = vmatmul.bf16.gmra.mxu0 %v597
    %v779 = vpop.f32.mrf.mxu0
    %v780 = vadd.f32 0.0, %v779
    %v781 = vpop.f32.mrf.mxu0
    %v782 = vadd.f32 0.0, %v781
    %783 = vmatmul.bf16.gmra.mxu0 %v598
    %v784 = vpop.f32.mrf.mxu0
    %v785 = vadd.f32 0.0, %v784
    %v786 = vpop.f32.mrf.mxu0
    %v787 = vadd.f32 0.0, %v786
    %788 = vmatmul.bf16.gmra.mxu0 %v599
    %v789 = vpop.f32.mrf.mxu0
    %v790 = vadd.f32 0.0, %v789
    %v791 = vpop.f32.mrf.mxu0
    %v792 = vadd.f32 0.0, %v791
    %793 = vdwg.mxu0
    %v794 = vld [vmem:[#allocation10] sm:$0x1]
    %v795 = vpack.c.bf16 %v708, %v706
    %v796 = vpack.c.bf16 %v713, %v711
    %v797 = vpack.c.bf16 %v718, %v716
    %v798 = vpack.c.bf16 %v723, %v721
    %v799 = vpack.c.bf16 %v728, %v726
    %v800 = vpack.c.bf16 %v733, %v731
    %v801 = vpack.c.bf16 %v738, %v736
    %v802 = vpack.c.bf16 %v743, %v741
    %803 = vmatpush.bf16.msra.mxu0 %v802
    %804 = vmatpush.bf16.msra.mxu0 %v801
    %805 = vmatpush.bf16.msra.mxu0 %v800
    %806 = vmatpush.bf16.msra.mxu0 %v799
    %807 = vmatpush.bf16.msra.mxu0 %v798
    %808 = vmatpush.bf16.msra.mxu0 %v797
    %809 = vmatpush.bf16.msra.mxu0 %v796
    %810 = vmatpush.bf16.msra.mxu0 %v795
    %811 = vmatmul.bf16.gmra.mxu0 %v456
    %v812 = vpop.f32.mrf.mxu0
    %v813 = vadd.f32 %v755, %v812
    %v814 = vpop.f32.mrf.mxu0
    %v815 = vadd.f32 %v757, %v814
    %816 = vmatmul.bf16.gmra.mxu0 %v457
    %v817 = vpop.f32.mrf.mxu0
    %v818 = vadd.f32 %v760, %v817
    %v819 = vpop.f32.mrf.mxu0
    %v820 = vadd.f32 %v762, %v819
    %821 = vmatmul.bf16.gmra.mxu0 %v458
    %v822 = vpop.f32.mrf.mxu0
    %v823 = vadd.f32 %v765, %v822
    %v824 = vpop.f32.mrf.mxu0
    %v825 = vadd.f32 %v767, %v824
    %826 = vmatmul.bf16.gmra.mxu0 %v459
    %v827 = vpop.f32.mrf.mxu0
    %v828 = vadd.f32 %v770, %v827
    %v829 = vpop.f32.mrf.mxu0
    %v830 = vadd.f32 %v772, %v829
    %831 = vmatmul.bf16.gmra.mxu0 %v460
    %v832 = vpop.f32.mrf.mxu0
    %v833 = vadd.f32 %v775, %v832
    %v834 = vpop.f32.mrf.mxu0
    %v835 = vadd.f32 %v777, %v834
    %836 = vmatmul.bf16.gmra.mxu0 %v461
    %v837 = vpop.f32.mrf.mxu0
    %v838 = vadd.f32 %v780, %v837
    %v839 = vpop.f32.mrf.mxu0
    %v840 = vadd.f32 %v782, %v839
    %841 = vmatmul.bf16.gmra.mxu0 %v462
    %v842 = vpop.f32.mrf.mxu0
    %v843 = vadd.f32 %v785, %v842
    %v844 = vpop.f32.mrf.mxu0
    %v845 = vadd.f32 %v787, %v844
    %846 = vmatmul.bf16.gmra.mxu0 %v463
    %v847 = vpop.f32.mrf.mxu0
    %v848 = vadd.f32 %v790, %v847
    %v849 = vpop.f32.mrf.mxu0
    %v850 = vadd.f32 %v792, %v849
    %851 = vdwg.mxu0
    %v852 = vperm.slane %v794, 0
    %v853 = vadd.f32 %v813, %v852
    %v854 = vadd.f32 %v815, %v852
    %v855 = vadd.f32 %v818, %v852
    %v856 = vadd.f32 %v820, %v852
    %v857 = vadd.f32 %v823, %v852
    %v858 = vadd.f32 %v825, %v852
    %v859 = vadd.f32 %v828, %v852
    %v860 = vadd.f32 %v830, %v852
    %v861 = vadd.f32 %v833, %v852
    %v862 = vadd.f32 %v835, %v852
    %v863 = vadd.f32 %v838, %v852
    %v864 = vadd.f32 %v840, %v852
    %v865 = vadd.f32 %v843, %v852
    %v866 = vadd.f32 %v845, %v852
    %v867 = vadd.f32 %v848, %v852
    %v868 = vadd.f32 %v850, %v852
    %v869 = vld [vmem:[%s6 + $0x1] sm:$0x1]
    %v870 = vperm.slane %v869, 0
    %v871 = vmul.f32 %v853, %v870
    %v872 = vmul.f32 %v854, %v870
    %v873 = vmul.f32 %v855, %v870
    %v874 = vmul.f32 %v856, %v870
    %v875 = vmul.f32 %v857, %v870
    %v876 = vmul.f32 %v858, %v870
    %v877 = vmul.f32 %v859, %v870
    %v878 = vmul.f32 %v860, %v870
    %v879 = vmul.f32 %v861, %v870
    %v880 = vmul.f32 %v862, %v870
    %v881 = vmul.f32 %v863, %v870
    %v882 = vmul.f32 %v864, %v870
    %v883 = vmul.f32 %v865, %v870
    %v884 = vmul.f32 %v866, %v870
    %v885 = vmul.f32 %v867, %v870
    %v886 = vmul.f32 %v868, %v870
    %v887 = vld [vmem:[#allocation12 + $0x1] sm:$0x1]
    %v888 = vperm.slane %v887, 0
    %v889 = vadd.f32 %v871, %v888
    %v890 = vadd.f32 %v872, %v888
    %v891 = vadd.f32 %v873, %v888
    %v892 = vadd.f32 %v874, %v888
    %v893 = vadd.f32 %v875, %v888
    %v894 = vadd.f32 %v876, %v888
    %v895 = vadd.f32 %v877, %v888
    %v896 = vadd.f32 %v878, %v888
    %v897 = vadd.f32 %v879, %v888
    %v898 = vadd.f32 %v880, %v888
    %v899 = vadd.f32 %v881, %v888
    %v900 = vadd.f32 %v882, %v888
    %v901 = vadd.f32 %v883, %v888
    %v902 = vadd.f32 %v884, %v888
    %v903 = vadd.f32 %v885, %v888
    %v904 = vadd.f32 %v886, %v888
    %v905 = vmax.f32 %v889, 0.0
    %v906 = vmax.f32 %v890, 0.0
    %v907 = vmax.f32 %v891, 0.0
    %v908 = vmax.f32 %v892, 0.0
    %v909 = vmax.f32 %v893, 0.0
    %v910 = vmax.f32 %v894, 0.0
    %v911 = vmax.f32 %v895, 0.0
    %v912 = vmax.f32 %v896, 0.0
    %v913 = vmax.f32 %v897, 0.0
    %v914 = vmax.f32 %v898, 0.0
    %v915 = vmax.f32 %v899, 0.0
    %v916 = vmax.f32 %v900, 0.0
    %v917 = vmax.f32 %v901, 0.0
    %v918 = vmax.f32 %v902, 0.0
    %v919 = vmax.f32 %v903, 0.0
    %v920 = vmax.f32 %v904, 0.0
    %v921 = vpack.c.bf16 %v906, %v905
    %v922 = vpack.c.bf16 %v908, %v907
    %v923 = vpack.c.bf16 %v910, %v909
    %v924 = vpack.c.bf16 %v912, %v911
    %v925 = vpack.c.bf16 %v914, %v913
    %v926 = vpack.c.bf16 %v916, %v915
    %v927 = vpack.c.bf16 %v918, %v917
    %v928 = vpack.c.bf16 %v920, %v919
    %s929 = scalar_lea.vmem [#allocation9], 128
    %v930 = vld [vmem:[%s929] sm:$0xff]
    %v931 = vld [vmem:[%s929 + $0x8] sm:$0xff]
    %v932 = vld [vmem:[%s929 + $0x10] sm:$0xff]
    %v933 = vld [vmem:[%s929 + $0x18] sm:$0xff]
    %v934 = vld [vmem:[%s929 + $0x20] sm:$0xff]
    %v935 = vld [vmem:[%s929 + $0x28] sm:$0xff]
    %v936 = vld [vmem:[%s929 + $0x30] sm:$0xff]
    %v937 = vld [vmem:[%s929 + $0x38] sm:$0xff]
    %v938 = vld [vmem:[%s929 + $0x40] sm:$0xff]
    %v939 = vld [vmem:[%s929 + $0x48] sm:$0xff]
    %v940 = vld [vmem:[%s929 + $0x50] sm:$0xff]
    %v941 = vld [vmem:[%s929 + $0x58] sm:$0xff]
    %v942 = vld [vmem:[%s929 + $0x60] sm:$0xff]
    %v943 = vld [vmem:[%s929 + $0x68] sm:$0xff]
    %v944 = vld [vmem:[%s929 + $0x70] sm:$0xff]
    %v945 = vld [vmem:[%s929 + $0x78] sm:$0xff]
    %v962 = vunpack.c.l.b16 %v930
    %v963 = vunpack.c.h.b16 %v930
    %v964 = vunpack.c.l.b16 %v931
    %v965 = vunpack.c.h.b16 %v931
    %v966 = vunpack.c.l.b16 %v932
    %v967 = vunpack.c.h.b16 %v932
    %v968 = vunpack.c.l.b16 %v933
    %v969 = vunpack.c.h.b16 %v933
    %v970 = vunpack.c.l.b16 %v934
    %v971 = vunpack.c.h.b16 %v934
    %v972 = vunpack.c.l.b16 %v935
    %v973 = vunpack.c.h.b16 %v935
    %v974 = vunpack.c.l.b16 %v936
    %v975 = vunpack.c.h.b16 %v936
    %v976 = vunpack.c.l.b16 %v937
    %v977 = vunpack.c.h.b16 %v937
    %v978 = vunpack.c.l.b16 %v938
    %v979 = vunpack.c.h.b16 %v938
    %v980 = vunpack.c.l.b16 %v939
    %v981 = vunpack.c.h.b16 %v939
    %v982 = vunpack.c.l.b16 %v940
    %v983 = vunpack.c.h.b16 %v940
    %v984 = vunpack.c.l.b16 %v941
    %v985 = vunpack.c.h.b16 %v941
    %v986 = vunpack.c.l.b16 %v942
    %v987 = vunpack.c.h.b16 %v942
    %v988 = vunpack.c.l.b16 %v943
    %v989 = vunpack.c.h.b16 %v943
    %v990 = vunpack.c.l.b16 %v944
    %v991 = vunpack.c.h.b16 %v944
    %v992 = vunpack.c.l.b16 %v945
    %v993 = vunpack.c.h.b16 %v945
    %v994 = vpack.c.b16 %v964, %v962
    %v995 = vpack.c.b16 %v965, %v963
    %v996 = vpack.c.b16 %v968, %v966
    %v997 = vpack.c.b16 %v969, %v967
    %v998 = vpack.c.b16 %v972, %v970
    %v999 = vpack.c.b16 %v973, %v971
    %v1000 = vpack.c.b16 %v976, %v974
    %v1001 = vpack.c.b16 %v977, %v975
    %v1002 = vpack.c.b16 %v980, %v978
    %v1003 = vpack.c.b16 %v981, %v979
    %v1004 = vpack.c.b16 %v984, %v982
    %v1005 = vpack.c.b16 %v985, %v983
    %v1006 = vpack.c.b16 %v988, %v986
    %v1007 = vpack.c.b16 %v989, %v987
    %v1008 = vpack.c.b16 %v992, %v990
    %v1009 = vpack.c.b16 %v993, %v991
    %1026 = vmatpush.bf16.msra.mxu0 %v1008
    %1027 = vmatpush.bf16.msra.mxu0 %v1006
    %1028 = vmatpush.bf16.msra.mxu0 %v1004
    %1029 = vmatpush.bf16.msra.mxu0 %v1002
    %1030 = vmatpush.bf16.msra.mxu0 %v1000
    %1031 = vmatpush.bf16.msra.mxu0 %v998
    %1032 = vmatpush.bf16.msra.mxu0 %v996
    %1033 = vmatpush.bf16.msra.mxu0 %v994
    %1034 = vmatmul.bf16.gmra.mxu0 %v921
    %v1035 = vpop.f32.mrf.mxu0
    %v1036 = vadd.f32 0.0, %v1035
    %v1037 = vpop.f32.mrf.mxu0
    %v1038 = vadd.f32 0.0, %v1037
    %1039 = vmatmul.bf16.gmra.mxu0 %v922
    %v1040 = vpop.f32.mrf.mxu0
    %v1041 = vadd.f32 0.0, %v1040
    %v1042 = vpop.f32.mrf.mxu0
    %v1043 = vadd.f32 0.0, %v1042
    %1044 = vmatmul.bf16.gmra.mxu0 %v923
    %v1045 = vpop.f32.mrf.mxu0
    %v1046 = vadd.f32 0.0, %v1045
    %v1047 = vpop.f32.mrf.mxu0
    %v1048 = vadd.f32 0.0, %v1047
    %1049 = vmatmul.bf16.gmra.mxu0 %v924
    %v1050 = vpop.f32.mrf.mxu0
    %v1051 = vadd.f32 0.0, %v1050
    %v1052 = vpop.f32.mrf.mxu0
    %v1053 = vadd.f32 0.0, %v1052
    %1054 = vmatmul.bf16.gmra.mxu0 %v925
    %v1055 = vpop.f32.mrf.mxu0
    %v1056 = vadd.f32 0.0, %v1055
    %v1057 = vpop.f32.mrf.mxu0
    %v1058 = vadd.f32 0.0, %v1057
    %1059 = vmatmul.bf16.gmra.mxu0 %v926
    %v1060 = vpop.f32.mrf.mxu0
    %v1061 = vadd.f32 0.0, %v1060
    %v1062 = vpop.f32.mrf.mxu0
    %v1063 = vadd.f32 0.0, %v1062
    %1064 = vmatmul.bf16.gmra.mxu0 %v927
    %v1065 = vpop.f32.mrf.mxu0
    %v1066 = vadd.f32 0.0, %v1065
    %v1067 = vpop.f32.mrf.mxu0
    %v1068 = vadd.f32 0.0, %v1067
    %1069 = vmatmul.bf16.gmra.mxu0 %v928
    %v1070 = vpop.f32.mrf.mxu0
    %v1071 = vadd.f32 0.0, %v1070
    %v1072 = vpop.f32.mrf.mxu0
    %v1073 = vadd.f32 0.0, %v1072
    %1074 = vdwg.mxu0
    %1075 = vmatpush.bf16.msra.mxu0 %v1009
    %1076 = vmatpush.bf16.msra.mxu0 %v1007
    %1077 = vmatpush.bf16.msra.mxu0 %v1005
    %1078 = vmatpush.bf16.msra.mxu0 %v1003
    %1079 = vmatpush.bf16.msra.mxu0 %v1001
    %1080 = vmatpush.bf16.msra.mxu0 %v999
    %1081 = vmatpush.bf16.msra.mxu0 %v997
    %1082 = vmatpush.bf16.msra.mxu0 %v995
    %1083 = vmatmul.bf16.gmra.mxu0 %v921
    %v1084 = vpop.f32.mrf.mxu0
    %v1085 = vadd.f32 0.0, %v1084
    %v1086 = vpop.f32.mrf.mxu0
    %v1087 = vadd.f32 0.0, %v1086
    %1088 = vmatmul.bf16.gmra.mxu0 %v922
    %v1089 = vpop.f32.mrf.mxu0
    %v1090 = vadd.f32 0.0, %v1089
    %v1091 = vpop.f32.mrf.mxu0
    %v1092 = vadd.f32 0.0, %v1091
    %1093 = vmatmul.bf16.gmra.mxu0 %v923
    %v1094 = vpop.f32.mrf.mxu0
    %v1095 = vadd.f32 0.0, %v1094
    %v1096 = vpop.f32.mrf.mxu0
    %v1097 = vadd.f32 0.0, %v1096
    %1098 = vmatmul.bf16.gmra.mxu0 %v924
    %v1099 = vpop.f32.mrf.mxu0
    %v1100 = vadd.f32 0.0, %v1099
    %v1101 = vpop.f32.mrf.mxu0
    %v1102 = vadd.f32 0.0, %v1101
    %1103 = vmatmul.bf16.gmra.mxu0 %v925
    %v1104 = vpop.f32.mrf.mxu0
    %v1105 = vadd.f32 0.0, %v1104
    %v1106 = vpop.f32.mrf.mxu0
    %v1107 = vadd.f32 0.0, %v1106
    %1108 = vmatmul.bf16.gmra.mxu0 %v926
    %v1109 = vpop.f32.mrf.mxu0
    %v1110 = vadd.f32 0.0, %v1109
    %v1111 = vpop.f32.mrf.mxu0
    %v1112 = vadd.f32 0.0, %v1111
    %1113 = vmatmul.bf16.gmra.mxu0 %v927
    %v1114 = vpop.f32.mrf.mxu0
    %v1115 = vadd.f32 0.0, %v1114
    %v1116 = vpop.f32.mrf.mxu0
    %v1117 = vadd.f32 0.0, %v1116
    %1118 = vmatmul.bf16.gmra.mxu0 %v928
    %v1119 = vpop.f32.mrf.mxu0
    %v1120 = vadd.f32 0.0, %v1119
    %v1121 = vpop.f32.mrf.mxu0
    %v1122 = vadd.f32 0.0, %v1121
    %1123 = vdwg.mxu0
    %v1124 = vld [vmem:[#allocation10 + $0x1] sm:$0x1]
    %v1125 = vpack.c.bf16 %v1038, %v1036
    %v1126 = vpack.c.bf16 %v1043, %v1041
    %v1127 = vpack.c.bf16 %v1048, %v1046
    %v1128 = vpack.c.bf16 %v1053, %v1051
    %v1129 = vpack.c.bf16 %v1058, %v1056
    %v1130 = vpack.c.bf16 %v1063, %v1061
    %v1131 = vpack.c.bf16 %v1068, %v1066
    %v1132 = vpack.c.bf16 %v1073, %v1071
    %1133 = vmatpush.bf16.msra.mxu0 %v1132
    %1134 = vmatpush.bf16.msra.mxu0 %v1131
    %1135 = vmatpush.bf16.msra.mxu0 %v1130
    %1136 = vmatpush.bf16.msra.mxu0 %v1129
    %1137 = vmatpush.bf16.msra.mxu0 %v1128
    %1138 = vmatpush.bf16.msra.mxu0 %v1127
    %1139 = vmatpush.bf16.msra.mxu0 %v1126
    %1140 = vmatpush.bf16.msra.mxu0 %v1125
    %1141 = vmatmul.bf16.gmra.mxu0 %v456
    %v1142 = vpop.f32.mrf.mxu0
    %v1143 = vadd.f32 %v1085, %v1142
    %v1144 = vpop.f32.mrf.mxu0
    %v1145 = vadd.f32 %v1087, %v1144
    %1146 = vmatmul.bf16.gmra.mxu0 %v457
    %v1147 = vpop.f32.mrf.mxu0
    %v1148 = vadd.f32 %v1090, %v1147
    %v1149 = vpop.f32.mrf.mxu0
    %v1150 = vadd.f32 %v1092, %v1149
    %1151 = vmatmul.bf16.gmra.mxu0 %v458
    %v1152 = vpop.f32.mrf.mxu0
    %v1153 = vadd.f32 %v1095, %v1152
    %v1154 = vpop.f32.mrf.mxu0
    %v1155 = vadd.f32 %v1097, %v1154
    %1156 = vmatmul.bf16.gmra.mxu0 %v459
    %v1157 = vpop.f32.mrf.mxu0
    %v1158 = vadd.f32 %v1100, %v1157
    %v1159 = vpop.f32.mrf.mxu0
    %v1160 = vadd.f32 %v1102, %v1159
    %1161 = vmatmul.bf16.gmra.mxu0 %v460
    %v1162 = vpop.f32.mrf.mxu0
    %v1163 = vadd.f32 %v1105, %v1162
    %v1164 = vpop.f32.mrf.mxu0
    %v1165 = vadd.f32 %v1107, %v1164
    %1166 = vmatmul.bf16.gmra.mxu0 %v461
    %v1167 = vpop.f32.mrf.mxu0
    %v1168 = vadd.f32 %v1110, %v1167
    %v1169 = vpop.f32.mrf.mxu0
    %v1170 = vadd.f32 %v1112, %v1169
    %1171 = vmatmul.bf16.gmra.mxu0 %v462
    %v1172 = vpop.f32.mrf.mxu0
    %v1173 = vadd.f32 %v1115, %v1172
    %v1174 = vpop.f32.mrf.mxu0
    %v1175 = vadd.f32 %v1117, %v1174
    %1176 = vmatmul.bf16.gmra.mxu0 %v463
    %v1177 = vpop.f32.mrf.mxu0
    %v1178 = vadd.f32 %v1120, %v1177
    %v1179 = vpop.f32.mrf.mxu0
    %v1180 = vadd.f32 %v1122, %v1179
    %1181 = vdwg.mxu0
    %v1182 = vperm.slane %v1124, 0
    %v1183 = vadd.f32 %v1143, %v1182
    %v1184 = vadd.f32 %v1145, %v1182
    %v1185 = vadd.f32 %v1148, %v1182
    %v1186 = vadd.f32 %v1150, %v1182
    %v1187 = vadd.f32 %v1153, %v1182
    %v1188 = vadd.f32 %v1155, %v1182
    %v1189 = vadd.f32 %v1158, %v1182
    %v1190 = vadd.f32 %v1160, %v1182
    %v1191 = vadd.f32 %v1163, %v1182
    %v1192 = vadd.f32 %v1165, %v1182
    %v1193 = vadd.f32 %v1168, %v1182
    %v1194 = vadd.f32 %v1170, %v1182
    %v1195 = vadd.f32 %v1173, %v1182
    %v1196 = vadd.f32 %v1175, %v1182
    %v1197 = vadd.f32 %v1178, %v1182
    %v1198 = vadd.f32 %v1180, %v1182
    %v1199 = vld [vmem:[%s6 + $0x2] sm:$0x1]
    %v1200 = vperm.slane %v1199, 0
    %v1201 = vmul.f32 %v1183, %v1200
    %v1202 = vmul.f32 %v1184, %v1200
    %v1203 = vmul.f32 %v1185, %v1200
    %v1204 = vmul.f32 %v1186, %v1200
    %v1205 = vmul.f32 %v1187, %v1200
    %v1206 = vmul.f32 %v1188, %v1200
    %v1207 = vmul.f32 %v1189, %v1200
    %v1208 = vmul.f32 %v1190, %v1200
    %v1209 = vmul.f32 %v1191, %v1200
    %v1210 = vmul.f32 %v1192, %v1200
    %v1211 = vmul.f32 %v1193, %v1200
    %v1212 = vmul.f32 %v1194, %v1200
    %v1213 = vmul.f32 %v1195, %v1200
    %v1214 = vmul.f32 %v1196, %v1200
    %v1215 = vmul.f32 %v1197, %v1200
    %v1216 = vmul.f32 %v1198, %v1200
    %v1217 = vld [vmem:[#allocation12 + $0x2] sm:$0x1]
    %v1218 = vperm.slane %v1217, 0
    %v1219 = vadd.f32 %v1201, %v1218
    %v1220 = vadd.f32 %v1202, %v1218
    %v1221 = vadd.f32 %v1203, %v1218
    %v1222 = vadd.f32 %v1204, %v1218
    %v1223 = vadd.f32 %v1205, %v1218
    %v1224 = vadd.f32 %v1206, %v1218
    %v1225 = vadd.f32 %v1207, %v1218
    %v1226 = vadd.f32 %v1208, %v1218
    %v1227 = vadd.f32 %v1209, %v1218
    %v1228 = vadd.f32 %v1210, %v1218
    %v1229 = vadd.f32 %v1211, %v1218
    %v1230 = vadd.f32 %v1212, %v1218
    %v1231 = vadd.f32 %v1213, %v1218
    %v1232 = vadd.f32 %v1214, %v1218
    %v1233 = vadd.f32 %v1215, %v1218
    %v1234 = vadd.f32 %v1216, %v1218
    %v1235 = vmax.f32 %v1219, 0.0
    %v1236 = vmax.f32 %v1220, 0.0
    %v1237 = vmax.f32 %v1221, 0.0
    %v1238 = vmax.f32 %v1222, 0.0
    %v1239 = vmax.f32 %v1223, 0.0
    %v1240 = vmax.f32 %v1224, 0.0
    %v1241 = vmax.f32 %v1225, 0.0
    %v1242 = vmax.f32 %v1226, 0.0
    %v1243 = vmax.f32 %v1227, 0.0
    %v1244 = vmax.f32 %v1228, 0.0
    %v1245 = vmax.f32 %v1229, 0.0
    %v1246 = vmax.f32 %v1230, 0.0
    %v1247 = vmax.f32 %v1231, 0.0
    %v1248 = vmax.f32 %v1232, 0.0
    %v1249 = vmax.f32 %v1233, 0.0
    %v1250 = vmax.f32 %v1234, 0.0
    %v1251 = vpack.c.bf16 %v1236, %v1235
    %v1252 = vpack.c.bf16 %v1238, %v1237
    %v1253 = vpack.c.bf16 %v1240, %v1239
    %v1254 = vpack.c.bf16 %v1242, %v1241
    %v1255 = vpack.c.bf16 %v1244, %v1243
    %v1256 = vpack.c.bf16 %v1246, %v1245
    %v1257 = vpack.c.bf16 %v1248, %v1247
    %v1258 = vpack.c.bf16 %v1250, %v1249
    %v1259 = vld [vmem:[#allocation13] sm:$0xf]
    %v1260 = vld [vmem:[#allocation13 + $0x4] sm:$0xf]
    %v1261 = vld [vmem:[#allocation13 + $0x8] sm:$0xf]
    %v1262 = vld [vmem:[#allocation13 + $0xc] sm:$0xf]
    %v1263 = vld [vmem:[#allocation13 + $0x10] sm:$0xf]
    %v1264 = vld [vmem:[#allocation13 + $0x14] sm:$0xf]
    %v1265 = vld [vmem:[#allocation13 + $0x18] sm:$0xf]
    %v1266 = vld [vmem:[#allocation13 + $0x1c] sm:$0xf]
    %v1267 = vld [vmem:[#allocation13 + $0x20] sm:$0xf]
    %v1268 = vld [vmem:[#allocation13 + $0x24] sm:$0xf]
    %v1269 = vld [vmem:[#allocation13 + $0x28] sm:$0xf]
    %v1270 = vld [vmem:[#allocation13 + $0x2c] sm:$0xf]
    %v1271 = vld [vmem:[#allocation13 + $0x30] sm:$0xf]
    %v1272 = vld [vmem:[#allocation13 + $0x34] sm:$0xf]
    %v1273 = vld [vmem:[#allocation13 + $0x38] sm:$0xf]
    %v1274 = vld [vmem:[#allocation13 + $0x3c] sm:$0xf]
    %v1275 = vld [vmem:[%s9] sm:$0x1]
    %v1277 = vperm.slane %v1275, 0
    %v1295 = vunpack.c.l.b16 %v1259
    %v1296 = vunpack.c.l.b16 %v1260
    %v1297 = vunpack.c.l.b16 %v1261
    %v1298 = vunpack.c.l.b16 %v1262
    %v1299 = vunpack.c.l.b16 %v1263
    %v1300 = vunpack.c.l.b16 %v1264
    %v1301 = vunpack.c.l.b16 %v1265
    %v1302 = vunpack.c.l.b16 %v1266
    %v1303 = vunpack.c.l.b16 %v1267
    %v1304 = vunpack.c.l.b16 %v1268
    %v1305 = vunpack.c.l.b16 %v1269
    %v1306 = vunpack.c.l.b16 %v1270
    %v1307 = vunpack.c.l.b16 %v1271
    %v1308 = vunpack.c.l.b16 %v1272
    %v1309 = vunpack.c.l.b16 %v1273
    %v1310 = vunpack.c.l.b16 %v1274
    %v1311 = vpack.c.b16 %v1296, %v1295
    %v1312 = vpack.c.b16 %v1298, %v1297
    %v1313 = vpack.c.b16 %v1300, %v1299
    %v1314 = vpack.c.b16 %v1302, %v1301
    %v1315 = vpack.c.b16 %v1304, %v1303
    %v1316 = vpack.c.b16 %v1306, %v1305
    %v1317 = vpack.c.b16 %v1308, %v1307
    %v1318 = vpack.c.b16 %v1310, %v1309
    %1327 = vmatpush.bf16.msra.mxu0 %v1318
    %1328 = vmatpush.bf16.msra.mxu0 %v1317
    %1329 = vmatpush.bf16.msra.mxu0 %v1316
    %1330 = vmatpush.bf16.msra.mxu0 %v1315
    %1331 = vmatpush.bf16.msra.mxu0 %v1314
    %1332 = vmatpush.bf16.msra.mxu0 %v1313
    %1333 = vmatpush.bf16.msra.mxu0 %v1312
    %1334 = vmatpush.bf16.msra.mxu0 %v1311
    %1335 = vmatmul.bf16.gmra.mxu0 %v1251
    %v1336 = vpop.f32.mrf.mxu0
    %v1337 = vadd.f32 %v1277, %v1336
    %v1338 = vpop.f32.mrf.mxu0
    %v1339 = vadd.f32 %v1277, %v1338
    %1340 = vmatmul.bf16.gmra.mxu0 %v1252
    %v1341 = vpop.f32.mrf.mxu0
    %v1342 = vadd.f32 %v1277, %v1341
    %v1343 = vpop.f32.mrf.mxu0
    %v1344 = vadd.f32 %v1277, %v1343
    %1345 = vmatmul.bf16.gmra.mxu0 %v1253
    %v1346 = vpop.f32.mrf.mxu0
    %v1347 = vadd.f32 %v1277, %v1346
    %v1348 = vpop.f32.mrf.mxu0
    %v1349 = vadd.f32 %v1277, %v1348
    %1350 = vmatmul.bf16.gmra.mxu0 %v1254
    %v1351 = vpop.f32.mrf.mxu0
    %v1352 = vadd.f32 %v1277, %v1351
    %v1353 = vpop.f32.mrf.mxu0
    %v1354 = vadd.f32 %v1277, %v1353
    %1355 = vmatmul.bf16.gmra.mxu0 %v1255
    %v1356 = vpop.f32.mrf.mxu0
    %v1357 = vadd.f32 %v1277, %v1356
    %v1358 = vpop.f32.mrf.mxu0
    %v1359 = vadd.f32 %v1277, %v1358
    %1360 = vmatmul.bf16.gmra.mxu0 %v1256
    %v1361 = vpop.f32.mrf.mxu0
    %v1362 = vadd.f32 %v1277, %v1361
    %v1363 = vpop.f32.mrf.mxu0
    %v1364 = vadd.f32 %v1277, %v1363
    %1365 = vmatmul.bf16.gmra.mxu0 %v1257
    %v1366 = vpop.f32.mrf.mxu0
    %v1367 = vadd.f32 %v1277, %v1366
    %v1368 = vpop.f32.mrf.mxu0
    %v1369 = vadd.f32 %v1277, %v1368
    %1370 = vmatmul.bf16.gmra.mxu0 %v1258
    %v1371 = vpop.f32.mrf.mxu0
    %v1372 = vadd.f32 %v1277, %v1371
    %v1373 = vpop.f32.mrf.mxu0
    %v1374 = vadd.f32 %v1277, %v1373
    %1375 = vdwg.mxu0
    %1376 = vst [vmem:[#allocation15] sm:$0xff] %v1337
    %1377 = vst [vmem:[#allocation15 + $0x8] sm:$0xff] %v1339
    %1378 = vst [vmem:[#allocation15 + $0x10] sm:$0xff] %v1342
    %1379 = vst [vmem:[#allocation15 + $0x18] sm:$0xff] %v1344
    %1380 = vst [vmem:[#allocation15 + $0x20] sm:$0xff] %v1347
    %1381 = vst [vmem:[#allocation15 + $0x28] sm:$0xff] %v1349
    %1382 = vst [vmem:[#allocation15 + $0x30] sm:$0xff] %v1352
    %1383 = vst [vmem:[#allocation15 + $0x38] sm:$0xff] %v1354
    %1384 = vst [vmem:[#allocation15 + $0x40] sm:$0xff] %v1357
    %1385 = vst [vmem:[#allocation15 + $0x48] sm:$0xff] %v1359
    %1386 = vst [vmem:[#allocation15 + $0x50] sm:$0xff] %v1362
    %1387 = vst [vmem:[#allocation15 + $0x58] sm:$0xff] %v1364
    %1388 = vst [vmem:[#allocation15 + $0x60] sm:$0xff] %v1367
    %1389 = vst [vmem:[#allocation15 + $0x68] sm:$0xff] %v1369
    %1390 = vst [vmem:[#allocation15 + $0x70] sm:$0xff] %v1372
    %1391 = vst [vmem:[#allocation15 + $0x78] sm:$0xff] %v1374
    // Predicated region
    $region66: #{tpu_custom_call.1} parent=1 // pred_check
      _
    $region67: #{tpu_custom_call.1} parent=1 // pred_check_branch
      %1393 = sbr.rel (0) target = $region69
    $region68: #{tpu_custom_call.1} parent=1 // pred_region
      %1395 = vsyncadd [#allocation6], 0
      %s1396 = sshll.u32 [#allocation15], 4
      %s1397 = int_to_ptr.vmem [resolvable:$true] %s1396
      %s1398 = sshll.u32 %s10, 4
      %s1399 = int_to_ptr.hbm [resolvable:$true] %s1398
      %1404 = dma.vmem_to_hbm [thread:$0]  %s1397, 2048, %s1399, [#allocation6], 128, 128, 8
    $region69: #{tpu_custom_call.1} parent=1 // pred_fallthru
      _
    // Predicated region
    $region70: #{tpu_custom_call.1} parent=1 // pred_check
      _
    $region71: #{tpu_custom_call.1} parent=1 // pred_check_branch
      %1406 = sbr.rel (0) target = $region73
    $region72: #{tpu_custom_call.1} parent=1 // pred_region
      %1408 = dma.done [#allocation6], 2048
    $region73: #{tpu_custom_call.1} parent=1 // pred_fallthru
      _
    %1409 = vsyncpa [#allocation5], 1
    %1410 = vsyncpa [#allocation8], 1
    %1411 = vsyncpa [#allocation11], 1
    %1412 = vsyncpa [#allocation14], 1
    %1413 = vsyncpa [#allocation6], 1
  %1414 = vsyncmov [#allocation3]
  %s1415 = vpop.sfrf %1414
  %p1416 = scmp.eq.s32.totalorder %s1415, 0
  %p1417 = pneg %p1416
  %1419 = shalt.err (%p1417)

</llo_original>
